<compile_context>
chip_gen: v7x
topology: tpu7x:2x2x1
jax: 0.10.0
libtpu: 0.0.40
codegen_flags: <defaults>
</compile_context>

<pallas_src>
import jax
import jax.numpy as jnp
from jax.experimental import pallas as pl
from jax.experimental.pallas import tpu as pltpu

_EPS = 1e-5


def _round8(n):
    return ((n + 7) // 8) * 8


# --------------------------------------------------------------------------
# Parameter folding / packing
# --------------------------------------------------------------------------
def fold_and_pack(params):
    """Fold LN affines into downstream linears; pack everything into one slab."""
    (w1, b1, g1, be1, w2, b2, g2, be2, w3, b3, wo, bo) = params
    D, H1 = w1.shape
    H2 = w2.shape[1]
    S = wo.shape[1]
    assert D <= 128 and H1 <= 128 and H2 <= 128 and S <= 128

    # LN1: gamma scales rows of w2, beta contributes beta @ w2 to b2.
    w2f = g1[0][:, None] * w2                      # (H1, H2)
    b2f = b2 + be1 @ w2                            # (1, H2)
    # LN2: gamma scales rows of w3, beta contributes beta @ w3 to b3.
    w3f = g2[0][:, None] * w3                      # (H2, 1)
    b3f = b3 + be2 @ w3                            # (1, 1)

    r_w1 = 0
    r_w2 = r_w1 + _round8(H1)
    r_b1 = r_w2 + _round8(H2)
    r_b2 = r_b1 + _round8(H1)
    r_w3 = r_b2 + _round8(H2)
    r_sc = r_w3 + _round8(H2)
    r_wo = r_sc + 8
    rows = r_wo + _round8(S)

    slab = jnp.zeros((rows, 128), jnp.float32)
    slab = slab.at[r_w1:r_w1 + H1, :D].set(w1.T)          # fc1 weight (transposed)
    slab = slab.at[r_w2:r_w2 + H2, :H1].set(w2f.T)        # fc2 weight (LN1 gamma folded)
    slab = slab.at[r_b1:r_b1 + H1, 0].set(b1[0])          # fc1 bias column
    slab = slab.at[r_b2:r_b2 + H2, 0].set(b2f[0])         # fc2 bias (LN1 beta folded)
    slab = slab.at[r_w3:r_w3 + H2, 0].set(w3f[:, 0])      # fc3 weight (LN2 gamma folded)
    slab = slab.at[r_sc, 0].set(b3f[0, 0])                # fc3 bias (LN2 beta folded)
    slab = slab.at[r_sc, 1].set(bo[0, 0])                 # output-layer bias
    slab = slab.at[r_wo:r_wo + S, :].set(                 # output-layer weights,
        jnp.broadcast_to(wo[0][:, None], (S, 128)))       # lane-replicated per row

    layout = dict(D=D, H1=H1, H2=H2, S=S, r_w1=r_w1, r_w2=r_w2, r_b1=r_b1,
                  r_b2=r_b2, r_w3=r_w3, r_sc=r_sc, r_wo=r_wo)
    return slab, layout


# --------------------------------------------------------------------------
# Kernel
# --------------------------------------------------------------------------
def _make_kernel(layout, block_batch):
    D, H1, H2, S = layout["D"], layout["H1"], layout["H2"], layout["S"]
    r_w1, r_w2 = layout["r_w1"], layout["r_w2"]
    r_b1, r_b2 = layout["r_b1"], layout["r_b2"]
    r_w3, r_sc, r_wo = layout["r_w3"], layout["r_sc"], layout["r_wo"]
    Bc = block_batch

    def kernel(xT_ref, slab_ref, out_ref):
        slab = slab_ref[...]
        w1T = slab[r_w1:r_w1 + H1, :D]           # (H1, D)
        w2T = slab[r_w2:r_w2 + H2, :H1]          # (H2, H1)  LN1 gamma folded
        b1c = slab[r_b1:r_b1 + H1, 0:1]          # (H1, 1)
        b2c = slab[r_b2:r_b2 + H2, 0:1]          # (H2, 1)   LN1 beta folded
        w3c = slab[r_w3:r_w3 + H2, 0:1]          # (H2, 1)   LN2 gamma folded
        b3s = slab[r_sc:r_sc + 1, 0:1]           # (1, 1)    LN2 beta folded
        bos = slab[r_sc:r_sc + 1, 1:2]           # (1, 1)
        woe = slab[r_wo:r_wo + S, :]             # (S, 128)  wo[s] lane-replicated

        x = xT_ref[...]                          # (D, S*Bc), column = s*Bc + b

        # fc1 -> relu -> layernorm (affine folded into fc2)
        h = jnp.dot(w1T, x, preferred_element_type=jnp.float32) + b1c   # (H1, M)
        h = jnp.maximum(h, 0.0)
        mu = jnp.mean(h, axis=0, keepdims=True)
        var = jnp.maximum(jnp.mean(h * h, axis=0, keepdims=True) - mu * mu, 0.0)
        h = (h - mu) * jax.lax.rsqrt(var + _EPS)

        # fc2 -> relu -> layernorm (affine folded into fc3)
        h = jnp.dot(w2T, h, preferred_element_type=jnp.float32) + b2c   # (H2, M)
        h = jnp.maximum(h, 0.0)
        mu = jnp.mean(h, axis=0, keepdims=True)
        var = jnp.maximum(jnp.mean(h * h, axis=0, keepdims=True) - mu * mu, 0.0)
        h = (h - mu) * jax.lax.rsqrt(var + _EPS)

        # fc3 (output width 1): VPU multiply + sublane reduce, no MXU round-trip.
        h3 = jnp.maximum(jnp.sum(h * w3c, axis=0, keepdims=True) + b3s, 0.0)  # (1, M)

        # Output linear over the stacked axis: columns are s-major, so the s-th
        # stacked row of all Bc instances is a lane-aligned (1, Bc) slice.
        acc = h3[:, 0:Bc] * woe[0:1, :Bc]
        for s in range(1, S):
            acc = acc + h3[:, s * Bc:(s + 1) * Bc] * woe[s:s + 1, :Bc]
        out_ref[...] = (acc + bos).astype(out_ref.dtype)

    return kernel


# --------------------------------------------------------------------------
# Wrappers
# --------------------------------------------------------------------------
def mlp3_hidden_relu2_batched(x, slab, layout, *, block_batch=128):
    """x: (B, S, D) -- B independent module invocations. Returns (B,) scalars."""
    B, S, D = x.shape
    assert S == layout["S"] and D == layout["D"]
    Bc = block_batch
    nsteps = pl.cdiv(B, Bc)
    Bp = nsteps * Bc
    if Bp != B:
        x = jnp.pad(x, ((0, Bp - B), (0, 0), (0, 0)))

    # Column order: step-major, then stacked-row (s)-major, then instance.
    # xT[d, i*S*Bc + s*Bc + b] == x[i*Bc + b, s, d]
    xT = jnp.transpose(
        x.astype(jnp.float32).reshape(nsteps, Bc, S, D), (3, 0, 2, 1)
    ).reshape(D, nsteps * S * Bc)

    Mcols = S * Bc
    H1, H2 = layout["H1"], layout["H2"]
    Mtot = Bp * S
    flops = int(2 * Mtot * (D * H1 + H1 * H2 + H2) + 12 * Mtot * (H1 + H2) + 4 * Mtot)
    bytes_accessed = int(4 * (xT.size + slab.size + Bp))

    out = pl.pallas_call(
        _make_kernel(layout, Bc),
        out_shape=jax.ShapeDtypeStruct((1, Bp), jnp.float32),
        grid=(nsteps,),
        in_specs=[
            pl.BlockSpec((D, Mcols), lambda i: (0, i)),      # per-step input tile
            pl.BlockSpec(slab.shape, lambda i: (0, 0)),      # resident param slab
        ],
        out_specs=pl.BlockSpec((1, Bc), lambda i: (0, i)),   # lane-dense output row
        compiler_params=pltpu.CompilerParams(
            dimension_semantics=("parallel",)),
        cost_estimate=pl.CostEstimate(
            flops=flops, transcendentals=int(2 * Mtot),
            bytes_accessed=bytes_accessed),
    )(xT, slab)
    return out[0, :B]


def mlp3_hidden_relu2(x_single, slab, layout):
    """Module-faithful forward: x_single (S, D) -> (1, 1)."""
    return mlp3_hidden_relu2_batched(x_single[None], slab, layout).reshape(1, 1)


# --------------------------------------------------------------------------
# Init + pure-JAX reference (uses unfolded params, mirrors the PyTorch forward)
# --------------------------------------------------------------------------
def init_params(key, input_dim, stacked_dim):
    h1 = input_dim // 2
    h2 = h1 // 2

    def linear(key, fan_in, fan_out):
        kw, kb = jax.random.split(key)
        bound = 1.0 / jnp.sqrt(fan_in)
        w = jax.random.uniform(kw, (fan_in, fan_out), jnp.float32, -bound, bound)
        b = jax.random.uniform(kb, (1, fan_out), jnp.float32, -bound, bound)
        return w, b

    k1, k2, k3, k4, k5, k6, k7, k8 = jax.random.split(key, 8)
    w1, b1 = linear(k1, input_dim, h1)
    w2, b2 = linear(k2, h1, h2)
    w3, b3 = linear(k3, h2, 1)
    wo, bo = linear(k4, stacked_dim, 1)
    wo = wo.T  # (1, stacked_dim): output weight as a row (torch (out=1, in=S))

    # Non-default LN affine (independent keys) so the folding path is exercised.
    g1 = 1.0 + 0.1 * jax.random.normal(k5, (1, h1), jnp.float32)
    be1 = 0.1 * jax.random.normal(k6, (1, h1), jnp.float32)
    g2 = 1.0 + 0.1 * jax.random.normal(k7, (1, h2), jnp.float32)
    be2 = 0.1 * jax.random.normal(k8, (1, h2), jnp.float32)
    return (w1, b1, g1, be1, w2, b2, g2, be2, w3, b3, wo, bo)


def reference(x, params):
    """x: (B, S, D). Returns (B,) = the module's (1,1) output per instance."""
    (w1, b1, g1, be1, w2, b2, g2, be2, w3, b3, wo, bo) = params

    def ln(h, g, be):
        mu = jnp.mean(h, axis=-1, keepdims=True)
        var = jnp.mean((h - mu) ** 2, axis=-1, keepdims=True)
        return (h - mu) * jax.lax.rsqrt(var + _EPS) * g + be

    h1 = ln(jax.nn.relu(x @ w1 + b1), g1, be1)        # (B, S, H1)
    h2 = ln(jax.nn.relu(h1 @ w2 + b2), g2, be2)       # (B, S, H2)
    h3 = jax.nn.relu(h2 @ w3 + b3)                    # (B, S, 1)
    return jnp.einsum("bs,s->b", h3[..., 0], wo[0]) + bo[0, 0]


# --------------------------------------------------------------------------
if __name__ == "__main__":
    input_dim = 32
    stacked_dim = 8
    batch = 256   # independent module invocations fused into one kernel call

    key = jax.random.PRNGKey(0)
    kx, kp = jax.random.split(key)
    x = jax.random.normal(kx, (batch, stacked_dim, input_dim), jnp.float32)
    params = init_params(kp, input_dim, stacked_dim)
    slab, layout = fold_and_pack(params)

    out = jax.block_until_ready(mlp3_hidden_relu2_batched(x, slab, layout))
    ref = reference(x, params)

    assert out.shape == (batch,)
    assert jnp.allclose(out, ref, atol=1e-3, rtol=1e-3), (out[:4], ref[:4])

    # Single-instance path matching the PyTorch module signature exactly.
    single = jax.block_until_ready(mlp3_hidden_relu2(x[0], slab, layout))
    assert single.shape == (1, 1)
    assert jnp.allclose(single[0, 0], ref[0], atol=1e-3, rtol=1e-3), (single, ref[0])

    print("KERNEL_OK")
</pallas_src>

<mosaic_0001>
module attributes {stable_mosaic.version = 11 : i64} {
  func.func @kernel(%arg0: i32, %arg1: memref<32x1024xf32, #tpu.memory_space<vmem>>, %arg2: memref<72x128xf32, #tpu.memory_space<vmem>>, %arg3: memref<1x128xf32, #tpu.memory_space<vmem>>) attributes {dimension_semantics = [#tpu.dimension_semantics<parallel>], iteration_bounds = array<i64: 2>, scalar_prefetch = 0 : i64, scratch_operands = 0 : i64, tpu.core_type = #tpu.core_type<tc>, window_params = [{transform_indices = @transform_0, window_bounds = array<i64: 32, 1024>}, {pipeline_mode = #tpu.pipeline_mode<synchronous>, transform_indices = @transform_1, window_bounds = array<i64: 72, 128>}, {transform_indices = @transform_2, window_bounds = array<i64: 1, 128>}]} {
    %c0 = arith.constant 0 : index
    %c0_0 = arith.constant 0 : index
    %0 = vector.load %arg2[%c0, %c0_0] : memref<72x128xf32, #tpu.memory_space<vmem>>, vector<72x128xf32>
    %1 = vector.extract_strided_slice %0 {offsets = [0, 0], sizes = [16, 32], strides = [1, 1]} : vector<72x128xf32> to vector<16x32xf32>
    %2 = vector.extract_strided_slice %0 {offsets = [16, 0], sizes = [8, 16], strides = [1, 1]} : vector<72x128xf32> to vector<8x16xf32>
    %3 = vector.extract_strided_slice %0 {offsets = [24, 0], sizes = [16, 1], strides = [1, 1]} : vector<72x128xf32> to vector<16x1xf32>
    %4 = vector.extract_strided_slice %0 {offsets = [40, 0], sizes = [8, 1], strides = [1, 1]} : vector<72x128xf32> to vector<8x1xf32>
    %5 = vector.extract_strided_slice %0 {offsets = [48, 0], sizes = [8, 1], strides = [1, 1]} : vector<72x128xf32> to vector<8x1xf32>
    %6 = vector.extract_strided_slice %0 {offsets = [56, 0], sizes = [1, 1], strides = [1, 1]} : vector<72x128xf32> to vector<1x1xf32>
    %7 = vector.extract_strided_slice %0 {offsets = [56, 1], sizes = [1, 1], strides = [1, 1]} : vector<72x128xf32> to vector<1x1xf32>
    %8 = vector.extract_strided_slice %0 {offsets = [64, 0], sizes = [8, 128], strides = [1, 1]} : vector<72x128xf32> to vector<8x128xf32>
    %c0_1 = arith.constant 0 : index
    %c0_2 = arith.constant 0 : index
    %9 = vector.load %arg1[%c0_1, %c0_2] : memref<32x1024xf32, #tpu.memory_space<vmem>>, vector<32x1024xf32>
    %cst = arith.constant dense<0.000000e+00> : vector<16x1024xf32>
    %10 = tpu.matmul %1, %9, %cst {dimension_numbers = #tpu.dot_dimension_numbers<[1], [0], [0], [1], [0, 0, 1, 1], [], []>} : vector<16x32xf32>, vector<32x1024xf32>, vector<16x1024xf32> -> vector<16x1024xf32>
    %11 = vector.broadcast %3 : vector<16x1xf32> to vector<16x1024xf32>
    %12 = arith.addf %10, %11 : vector<16x1024xf32>
    %cst_3 = arith.constant 0.000000e+00 : f32
    %13 = vector.broadcast %cst_3 : f32 to vector<16x1024xf32>
    %14 = arith.maximumf %12, %13 : vector<16x1024xf32>
    %cst_4 = arith.constant dense<0.000000e+00> : vector<1024xf32>
    %15 = vector.multi_reduction <add>, %14, %cst_4 [0] : vector<16x1024xf32> to vector<1024xf32>
    %16 = vector.shape_cast %15 : vector<1024xf32> to vector<1x1024xf32>
    %cst_5 = arith.constant 1.600000e+01 : f32
    %17 = vector.broadcast %cst_5 : f32 to vector<1x1024xf32>
    %18 = arith.divf %16, %17 : vector<1x1024xf32>
    %19 = arith.mulf %14, %14 : vector<16x1024xf32>
    %cst_6 = arith.constant dense<0.000000e+00> : vector<1024xf32>
    %20 = vector.multi_reduction <add>, %19, %cst_6 [0] : vector<16x1024xf32> to vector<1024xf32>
    %21 = vector.shape_cast %20 : vector<1024xf32> to vector<1x1024xf32>
    %cst_7 = arith.constant 1.600000e+01 : f32
    %22 = vector.broadcast %cst_7 : f32 to vector<1x1024xf32>
    %23 = arith.divf %21, %22 : vector<1x1024xf32>
    %24 = arith.mulf %18, %18 : vector<1x1024xf32>
    %25 = arith.subf %23, %24 : vector<1x1024xf32>
    %cst_8 = arith.constant 0.000000e+00 : f32
    %26 = vector.broadcast %cst_8 : f32 to vector<1x1024xf32>
    %27 = arith.maximumf %25, %26 : vector<1x1024xf32>
    %28 = vector.broadcast %18 : vector<1x1024xf32> to vector<16x1024xf32>
    %29 = arith.subf %14, %28 : vector<16x1024xf32>
    %cst_9 = arith.constant 9.99999974E-6 : f32
    %30 = vector.broadcast %cst_9 : f32 to vector<1x1024xf32>
    %31 = arith.addf %27, %30 : vector<1x1024xf32>
    %32 = math.rsqrt %31 : vector<1x1024xf32>
    %33 = vector.broadcast %32 : vector<1x1024xf32> to vector<16x1024xf32>
    %34 = arith.mulf %29, %33 : vector<16x1024xf32>
    %cst_10 = arith.constant dense<0.000000e+00> : vector<8x1024xf32>
    %35 = tpu.matmul %2, %34, %cst_10 {dimension_numbers = #tpu.dot_dimension_numbers<[1], [0], [0], [1], [0, 0, 1, 1], [], []>} : vector<8x16xf32>, vector<16x1024xf32>, vector<8x1024xf32> -> vector<8x1024xf32>
    %36 = vector.broadcast %4 : vector<8x1xf32> to vector<8x1024xf32>
    %37 = arith.addf %35, %36 : vector<8x1024xf32>
    %cst_11 = arith.constant 0.000000e+00 : f32
    %38 = vector.broadcast %cst_11 : f32 to vector<8x1024xf32>
    %39 = arith.maximumf %37, %38 : vector<8x1024xf32>
    %cst_12 = arith.constant dense<0.000000e+00> : vector<1024xf32>
    %40 = vector.multi_reduction <add>, %39, %cst_12 [0] : vector<8x1024xf32> to vector<1024xf32>
    %41 = vector.shape_cast %40 : vector<1024xf32> to vector<1x1024xf32>
    %cst_13 = arith.constant 8.000000e+00 : f32
    %42 = vector.broadcast %cst_13 : f32 to vector<1x1024xf32>
    %43 = arith.divf %41, %42 : vector<1x1024xf32>
    %44 = arith.mulf %39, %39 : vector<8x1024xf32>
    %cst_14 = arith.constant dense<0.000000e+00> : vector<1024xf32>
    %45 = vector.multi_reduction <add>, %44, %cst_14 [0] : vector<8x1024xf32> to vector<1024xf32>
    %46 = vector.shape_cast %45 : vector<1024xf32> to vector<1x1024xf32>
    %cst_15 = arith.constant 8.000000e+00 : f32
    %47 = vector.broadcast %cst_15 : f32 to vector<1x1024xf32>
    %48 = arith.divf %46, %47 : vector<1x1024xf32>
    %49 = arith.mulf %43, %43 : vector<1x1024xf32>
    %50 = arith.subf %48, %49 : vector<1x1024xf32>
    %cst_16 = arith.constant 0.000000e+00 : f32
    %51 = vector.broadcast %cst_16 : f32 to vector<1x1024xf32>
    %52 = arith.maximumf %50, %51 : vector<1x1024xf32>
    %53 = vector.broadcast %43 : vector<1x1024xf32> to vector<8x1024xf32>
    %54 = arith.subf %39, %53 : vector<8x1024xf32>
    %cst_17 = arith.constant 9.99999974E-6 : f32
    %55 = vector.broadcast %cst_17 : f32 to vector<1x1024xf32>
    %56 = arith.addf %52, %55 : vector<1x1024xf32>
    %57 = math.rsqrt %56 : vector<1x1024xf32>
    %58 = vector.broadcast %57 : vector<1x1024xf32> to vector<8x1024xf32>
    %59 = arith.mulf %54, %58 : vector<8x1024xf32>
    %60 = vector.broadcast %5 : vector<8x1xf32> to vector<8x1024xf32>
    %61 = arith.mulf %59, %60 : vector<8x1024xf32>
    %cst_18 = arith.constant dense<0.000000e+00> : vector<1024xf32>
    %62 = vector.multi_reduction <add>, %61, %cst_18 [0] : vector<8x1024xf32> to vector<1024xf32>
    %63 = vector.shape_cast %62 : vector<1024xf32> to vector<1x1024xf32>
    %64 = vector.broadcast %6 : vector<1x1xf32> to vector<1x1024xf32>
    %65 = arith.addf %63, %64 : vector<1x1024xf32>
    %cst_19 = arith.constant 0.000000e+00 : f32
    %66 = vector.broadcast %cst_19 : f32 to vector<1x1024xf32>
    %67 = arith.maximumf %65, %66 : vector<1x1024xf32>
    %68 = vector.extract_strided_slice %67 {offsets = [0, 0], sizes = [1, 128], strides = [1, 1]} : vector<1x1024xf32> to vector<1x128xf32>
    %69 = vector.extract_strided_slice %8 {offsets = [0, 0], sizes = [1, 128], strides = [1, 1]} : vector<8x128xf32> to vector<1x128xf32>
    %70 = arith.mulf %68, %69 : vector<1x128xf32>
    %71 = vector.extract_strided_slice %67 {offsets = [0, 128], sizes = [1, 128], strides = [1, 1]} : vector<1x1024xf32> to vector<1x128xf32>
    %72 = vector.extract_strided_slice %8 {offsets = [1, 0], sizes = [1, 128], strides = [1, 1]} : vector<8x128xf32> to vector<1x128xf32>
    %73 = arith.mulf %71, %72 : vector<1x128xf32>
    %74 = arith.addf %70, %73 : vector<1x128xf32>
    %75 = vector.extract_strided_slice %67 {offsets = [0, 256], sizes = [1, 128], strides = [1, 1]} : vector<1x1024xf32> to vector<1x128xf32>
    %76 = vector.extract_strided_slice %8 {offsets = [2, 0], sizes = [1, 128], strides = [1, 1]} : vector<8x128xf32> to vector<1x128xf32>
    %77 = arith.mulf %75, %76 : vector<1x128xf32>
    %78 = arith.addf %74, %77 : vector<1x128xf32>
    %79 = vector.extract_strided_slice %67 {offsets = [0, 384], sizes = [1, 128], strides = [1, 1]} : vector<1x1024xf32> to vector<1x128xf32>
    %80 = vector.extract_strided_slice %8 {offsets = [3, 0], sizes = [1, 128], strides = [1, 1]} : vector<8x128xf32> to vector<1x128xf32>
    %81 = arith.mulf %79, %80 : vector<1x128xf32>
    %82 = arith.addf %78, %81 : vector<1x128xf32>
    %83 = vector.extract_strided_slice %67 {offsets = [0, 512], sizes = [1, 128], strides = [1, 1]} : vector<1x1024xf32> to vector<1x128xf32>
    %84 = vector.extract_strided_slice %8 {offsets = [4, 0], sizes = [1, 128], strides = [1, 1]} : vector<8x128xf32> to vector<1x128xf32>
    %85 = arith.mulf %83, %84 : vector<1x128xf32>
    %86 = arith.addf %82, %85 : vector<1x128xf32>
    %87 = vector.extract_strided_slice %67 {offsets = [0, 640], sizes = [1, 128], strides = [1, 1]} : vector<1x1024xf32> to vector<1x128xf32>
    %88 = vector.extract_strided_slice %8 {offsets = [5, 0], sizes = [1, 128], strides = [1, 1]} : vector<8x128xf32> to vector<1x128xf32>
    %89 = arith.mulf %87, %88 : vector<1x128xf32>
    %90 = arith.addf %86, %89 : vector<1x128xf32>
    %91 = vector.extract_strided_slice %67 {offsets = [0, 768], sizes = [1, 128], strides = [1, 1]} : vector<1x1024xf32> to vector<1x128xf32>
    %92 = vector.extract_strided_slice %8 {offsets = [6, 0], sizes = [1, 128], strides = [1, 1]} : vector<8x128xf32> to vector<1x128xf32>
    %93 = arith.mulf %91, %92 : vector<1x128xf32>
    %94 = arith.addf %90, %93 : vector<1x128xf32>
    %95 = vector.extract_strided_slice %67 {offsets = [0, 896], sizes = [1, 128], strides = [1, 1]} : vector<1x1024xf32> to vector<1x128xf32>
    %96 = vector.extract_strided_slice %8 {offsets = [7, 0], sizes = [1, 128], strides = [1, 1]} : vector<8x128xf32> to vector<1x128xf32>
    %97 = arith.mulf %95, %96 : vector<1x128xf32>
    %98 = arith.addf %94, %97 : vector<1x128xf32>
    %99 = vector.broadcast %7 : vector<1x1xf32> to vector<1x128xf32>
    %100 = arith.addf %98, %99 : vector<1x128xf32>
    %c0_20 = arith.constant 0 : index
    %c0_21 = arith.constant 0 : index
    %101 = vector.load %arg3[%c0_20, %c0_21] : memref<1x128xf32, #tpu.memory_space<vmem>>, vector<1x128xf32>
    tpu.vector_store %arg3[%c0_20, %c0_21], %100 {strides = array<i32>} : memref<1x128xf32, #tpu.memory_space<vmem>>, vector<1x128xf32>,
    return
  }
  func.func @transform_0(%arg0: i32) -> (i32, i32) {
    %c0_i32 = arith.constant 0 : i32
    %c0_i32_0 = arith.constant 0 : i32
    return %c0_i32, %arg0 : i32, i32
  }
  func.func @transform_1(%arg0: i32) -> (i32, i32) {
    %c0_i32 = arith.constant 0 : i32
    %c0_i32_0 = arith.constant 0 : i32
    %c0_i32_1 = arith.constant 0 : i32
    return %c0_i32, %c0_i32_0 : i32, i32
  }
  func.func @transform_2(%arg0: i32) -> (i32, i32) {
    %c0_i32 = arith.constant 0 : i32
    %c0_i32_0 = arith.constant 0 : i32
    return %c0_i32, %arg0 : i32, i32
  }
}

</mosaic_0001>

<llo_original>
// kernel: tpu_custom_call.1
$region0: #{tpu_custom_call.1}
  #allocation0 [shape = 'u32[]', space=smem, size = 0x4, offset = 0x4, fixed_abs, tag = 'smem constant byte address 0x4 - core index']
  #allocation1 [shape = 'u32[144,128]{1,0:T(1,128)}', space=vmem, size = 0x12000, scoped, tag = 'internal scratch']
  %s0 = inlined_call_operand.hbm [shape: f32[32,2048], index: 0, kind: input, shape index: {}]
  %s1 = inlined_call_operand.hbm [shape: f32[72,128], index: 1, kind: input, shape index: {}]
  %s2 = inlined_call_operand.hbm [shape: f32[1,256], index: 2, kind: output, shape index: {}]
  %s3 = sld [smem:[#allocation0]]
  $region49: #{tpu_custom_call.1} parent=0
    _
  %s5 = ssub.s32 1, %s3
  %s6 = scalar_select 0, %s5, %s3
  $region1: #{tpu_custom_call.1} parent=0
    #allocation2 [shape = 'u8[262144]{0}', space=vmem, size = 0x40000, scoped, tag = 'input window, operand 0']
    #allocation3 [shape = 's32[2]{0}', space=sflag, size = 0x8, scoped, tag = 'scoped memory for tpu_custom_call.1']
    #allocation4 [shape = 's32[2]{0}', space=sflag, size = 0x8, scoped, tag = 'scoped memory for tpu_custom_call.1']
    #allocation5 [shape = 'u8[36864]{0}', space=vmem, size = 0x9000, scoped, tag = 'input window, operand 1, single buffered']
    #allocation6 [shape = 's32[1]{0}', space=sflag, size = 0x4, scoped, tag = 'scoped memory for tpu_custom_call.1']
    #allocation7 [shape = 'u8[1024]{0}', space=vmem, size = 0x400, scoped, tag = 'output window, operand 0']
    %7 = vsyncpa [#allocation3], 0
    %s8 = scalar_lea.sflag [#allocation3], 1
    %9 = vsyncpa %s8, 0
    %10 = vsyncpa [#allocation6], 0
    %11 = vsyncpa [#allocation4], 0
    %s12 = scalar_lea.sflag [#allocation4], 1
    %13 = vsyncpa %s12, 0
    loop: start=0, step=1, limit=4
    $region2: #{tpu_custom_call.1} parent=1 // loop_pre_header
      _
    $region3: #{tpu_custom_call.1} parent=1 // loop_header
      %s15 = sphi 0, %s19
      %p16 = scmp.ge.s32.totalorder %s15, 4
      %s25 = sphi 0, %s27
      %s28 = sphi 0, %s25
      %s29 = sphi 0, %s28
      %s45 = sphi 0, %s29
      %s49 = sphi 0, %s49
      %s51 = sphi 0, %s49
      %s52 = sphi 0, %s51
      %s66 = sphi 0, %s52
      %s72 = sphi 0, %s74
      %s75 = sphi 0, %s72
      %s76 = sphi 0, %s75
      %s92 = sphi 0, %s76
    $region4: #{tpu_custom_call.1} parent=1 // loop_header_branch
      %18 = sbr.rel (%p16) target = $region8
    $region5: #{tpu_custom_call.1} parent=1 // loop_body
      %s20 = ssub.s32 %s15, 1
      %s21 = ssub.s32 %s15, 2
      %s22 = sadd.s32 %s15, 1
      %s23 = ssub.s32 %s15, %s22
      %p24 = scmp.eq.s32.totalorder %s23, 0
      %s26 = sadd.s32 %s25, 1
      %s27 = scalar_select %p24, %s25, %s26
      %p30 = pneg %p24
      %p31 = scmp.eq.s32.totalorder %s15, 1
      %p32 = por %p30, %p31
      %p33 = scmp.ne.s32.totalorder %s25, %s28
      %p34 = scmp.eq.s32.totalorder %s15, 0
      %p35 = por %p33, %p34
      %p36 = scmp.ne.s32.totalorder %s25, %s28
      %p37 = scmp.eq.s32.totalorder %s20, 1
      %p38 = por %p36, %p37
      %p39 = scmp.ne.s32.totalorder %s28, %s29
      %p40 = scmp.eq.s32.totalorder %s20, 0
      %p41 = por %p39, %p40
      %p42 = scmp.ne.s32.totalorder %s28, %s29
      %p43 = scmp.eq.s32.totalorder %s21, 1
      %p44 = por %p42, %p43
      %p46 = scmp.ne.s32.totalorder %s29, %s45
      %p47 = scmp.eq.s32.totalorder %s21, 0
      %p48 = por %p46, %p47
      %s50 = sadd.s32 %s49, 1
      %p53 = scmp.eq.s32.totalorder %s15, 1
      %p54 = scmp.ne.s32.totalorder %s49, %s51
      %p55 = scmp.eq.s32.totalorder %s15, 0
      %p56 = por %p54, %p55
      %p57 = scmp.ne.s32.totalorder %s49, %s51
      %p58 = scmp.eq.s32.totalorder %s20, 1
      %p59 = por %p57, %p58
      %p60 = scmp.ne.s32.totalorder %s51, %s52
      %p61 = scmp.eq.s32.totalorder %s20, 0
      %p62 = por %p60, %p61
      %p63 = scmp.ne.s32.totalorder %s51, %s52
      %p64 = scmp.eq.s32.totalorder %s21, 1
      %p65 = por %p63, %p64
      %p67 = scmp.ne.s32.totalorder %s52, %s66
      %p68 = scmp.eq.s32.totalorder %s21, 0
      %p69 = por %p67, %p68
      %s70 = ssub.s32 %s15, %s22
      %p71 = scmp.eq.s32.totalorder %s70, 0
      %s73 = sadd.s32 %s72, 1
      %s74 = scalar_select %p71, %s72, %s73
      %p77 = pneg %p71
      %p78 = scmp.eq.s32.totalorder %s15, 1
      %p79 = por %p77, %p78
      %p80 = scmp.ne.s32.totalorder %s72, %s75
      %p81 = scmp.eq.s32.totalorder %s15, 0
      %p82 = por %p80, %p81
      %p83 = scmp.ne.s32.totalorder %s72, %s75
      %p84 = scmp.eq.s32.totalorder %s20, 1
      %p85 = por %p83, %p84
      %p86 = scmp.ne.s32.totalorder %s75, %s76
      %p87 = scmp.eq.s32.totalorder %s20, 0
      %p88 = por %p86, %p87
      %p89 = scmp.ne.s32.totalorder %s75, %s76
      %p90 = scmp.eq.s32.totalorder %s21, 1
      %p91 = por %p89, %p90
      %p93 = scmp.ne.s32.totalorder %s76, %s92
      %p94 = scmp.eq.s32.totalorder %s21, 0
      %p95 = por %p93, %p94
      %p96 = scmp.le.s32.totalorder 1, %s15
      %p97 = scmp.lt.s32.totalorder %s15, 3
      %p98 = pnand %p96, %p97
      %p99 = pneg %p98
      // Predicated region
      $region9: #{tpu_custom_call.1} parent=5 // pred_check
        _
      $region10: #{tpu_custom_call.1} parent=5 // pred_check_branch
        %101 = sbr.rel (%p98) target = $region12
      $region11: #{tpu_custom_call.1} parent=5 // pred_region
        %s102 = ssub.s32 %s15, 1
        // Predicated region
        $region13: #{tpu_custom_call.1} parent=11 // pred_check
          %p103 = pneg %p62
        $region14: #{tpu_custom_call.1} parent=11 // pred_check_branch
          %105 = sbr.rel (%p103) target = $region16
        $region15: #{tpu_custom_call.1} parent=11 // pred_region
          %s107 = ssub.s32 1152, 1152
          %108 = vsyncadd [#allocation6], %s107
          %s109 = sshll.u32 [#allocation5], 4
          %s110 = int_to_ptr.vmem [resolvable:$true] %s109
          %115 = dma.hbm_to_vmem [thread:$0]  %s1, 1152, %s110, [#allocation6], 128, 128, 8
        $region16: #{tpu_custom_call.1} parent=11 // pred_fallthru
          _
      $region12: #{tpu_custom_call.1} parent=5 // pred_fallthru
        _
      %p116 = scmp.lt.s32.totalorder %s15, 2
      // Predicated region
      $region17: #{tpu_custom_call.1} parent=5 // pred_check
        %p117 = pneg %p116
      $region18: #{tpu_custom_call.1} parent=5 // pred_check_branch
        %119 = sbr.rel (%p117) target = $region20
      $region19: #{tpu_custom_call.1} parent=5 // pred_region
        // Predicated region
        $region21: #{tpu_custom_call.1} parent=19 // pred_check
          %p120 = pneg %p35
        $region22: #{tpu_custom_call.1} parent=19 // pred_check_branch
          %122 = sbr.rel (%p120) target = $region24
        $region23: #{tpu_custom_call.1} parent=19 // pred_region
          %s123 = sand.u32 %s25, 1
          %s124 = scalar_lea.sflag [#allocation3], %s123
          %s125 = sand.u32 %s25, 1
          %s126 = smul.addr %s125, 256
          %s127 = scalar_lea.vmem [#allocation2], %s126
          %s128 = smul.u32 8, %s15
          %s130 = ssub.s32 4096, 4096
          %131 = vsyncadd %s124, %s130
          %s132 = smul.addr %s128, 128
          %s133 = scalar_lea.hbm %s0, %s132
          %s134 = sshll.u32 %s127, 4
          %s135 = int_to_ptr.vmem [resolvable:$true] %s134
          %140 = dma.hbm_to_vmem [thread:$0]  %s133, 4096, %s135, %s124, 2048, 1024, 64
        $region24: #{tpu_custom_call.1} parent=19 // pred_fallthru
          _
      $region20: #{tpu_custom_call.1} parent=5 // pred_fallthru
        _
      %p141 = scmp.le.s32.totalorder 1, %s15
      %p142 = scmp.lt.s32.totalorder %s15, 3
      %p143 = pnand %p141, %p142
      %p144 = pneg %p143
      // Predicated region
      $region25: #{tpu_custom_call.1} parent=5 // pred_check
        _
      $region26: #{tpu_custom_call.1} parent=5 // pred_check_branch
        %146 = sbr.rel (%p143) target = $region28
      $region27: #{tpu_custom_call.1} parent=5 // pred_region
        %s147 = ssub.s32 %s15, 1
        %s148 = sand.u32 %s28, 1
        %s149 = scalar_lea.sflag [#allocation3], %s148
        %s150 = sand.u32 %s28, 1
        %s151 = smul.addr %s150, 256
        %s152 = scalar_lea.vmem [#allocation2], %s151
        // Predicated region
        $region29: #{tpu_custom_call.1} parent=27 // pred_check
          %p153 = pneg %p41
        $region30: #{tpu_custom_call.1} parent=27 // pred_check_branch
          %155 = sbr.rel (%p153) target = $region32
        $region31: #{tpu_custom_call.1} parent=27 // pred_region
          %156 = dma.done %s149, 4096
        $region32: #{tpu_custom_call.1} parent=27 // pred_fallthru
          _
        // Predicated region
        $region33: #{tpu_custom_call.1} parent=27 // pred_check
          %p157 = pneg %p62
        $region34: #{tpu_custom_call.1} parent=27 // pred_check_branch
          %159 = sbr.rel (%p157) target = $region36
        $region35: #{tpu_custom_call.1} parent=27 // pred_region
          %160 = dma.done [#allocation6], 1152
        $region36: #{tpu_custom_call.1} parent=27 // pred_fallthru
          _
        %s161 = sand.u32 %s28, 1
        %s162 = scalar_lea.sflag [#allocation3], %s161
        %s163 = sand.u32 %s28, 1
        %s164 = smul.addr %s163, 256
        %s165 = scalar_lea.vmem [#allocation2], %s164
        %p166 = pneg %p41
        %p167 = pneg %p38
        %p168 = pneg %p62
        %p169 = pneg %p59
        %p170 = pneg %p88
        %p171 = pneg %p85
        %s172 = sand.u32 %s75, 1
        %s173 = scalar_lea.sflag [#allocation4], %s172
        %s174 = sand.u32 %s75, 1
        %s175 = scalar_lea.vmem [#allocation7], %s174
        %s176 = smul.u32 8, %s20
        %v177 = vld [vmem:[#allocation5] sm:$0xff]
        %v178 = vld [vmem:[#allocation5 + $0x8] sm:$0xff]
        %v179 = vld [vmem:[#allocation5 + $0x10] sm:$0xff]
        %v180 = vld [vmem:[#allocation5 + $0x18] sm:$0xff]
        %v181 = vld [vmem:[#allocation5 + $0x20] sm:$0xff]
        %v182 = vld [vmem:[#allocation5 + $0x28] sm:$0xff]
        %v183 = vld [vmem:[#allocation5 + $0x30] sm:$0xff]
        %v184 = vld [vmem:[#allocation5 + $0x38] sm:$0xff]
        %v185 = vld [vmem:[#allocation5 + $0x40] sm:$0xff]
        %v186 = vld [vmem:[%s152] sm:$0xff]
        %v187 = vld [vmem:[%s152 + $0x8] sm:$0xff]
        %v188 = vld [vmem:[%s152 + $0x10] sm:$0xff]
        %v189 = vld [vmem:[%s152 + $0x18] sm:$0xff]
        %v190 = vld [vmem:[%s152 + $0x20] sm:$0xff]
        %v191 = vld [vmem:[%s152 + $0x28] sm:$0xff]
        %v192 = vld [vmem:[%s152 + $0x30] sm:$0xff]
        %v193 = vld [vmem:[%s152 + $0x38] sm:$0xff]
        %v194 = vld [vmem:[%s152 + $0x40] sm:$0xff]
        %v195 = vld [vmem:[%s152 + $0x48] sm:$0xff]
        %v196 = vld [vmem:[%s152 + $0x50] sm:$0xff]
        %v197 = vld [vmem:[%s152 + $0x58] sm:$0xff]
        %v198 = vld [vmem:[%s152 + $0x60] sm:$0xff]
        %v199 = vld [vmem:[%s152 + $0x68] sm:$0xff]
        %v200 = vld [vmem:[%s152 + $0x70] sm:$0xff]
        %v201 = vld [vmem:[%s152 + $0x78] sm:$0xff]
        %v202 = vld [vmem:[%s152 + $0x80] sm:$0xff]
        %v203 = vld [vmem:[%s152 + $0x88] sm:$0xff]
        %v204 = vld [vmem:[%s152 + $0x90] sm:$0xff]
        %v205 = vld [vmem:[%s152 + $0x98] sm:$0xff]
        %v206 = vld [vmem:[%s152 + $0xa0] sm:$0xff]
        %v207 = vld [vmem:[%s152 + $0xa8] sm:$0xff]
        %v208 = vld [vmem:[%s152 + $0xb0] sm:$0xff]
        %v209 = vld [vmem:[%s152 + $0xb8] sm:$0xff]
        %v210 = vld [vmem:[%s152 + $0xc0] sm:$0xff]
        %v211 = vld [vmem:[%s152 + $0xc8] sm:$0xff]
        %v212 = vld [vmem:[%s152 + $0xd0] sm:$0xff]
        %v213 = vld [vmem:[%s152 + $0xd8] sm:$0xff]
        %v214 = vld [vmem:[%s152 + $0xe0] sm:$0xff]
        %v215 = vld [vmem:[%s152 + $0xe8] sm:$0xff]
        %v216 = vld [vmem:[%s152 + $0xf0] sm:$0xff]
        %v217 = vld [vmem:[%s152 + $0xf8] sm:$0xff]
        %219 = vset.pattern.permute.xlu0 0
        %220 = vperm.xlu0 %219, %v180
        %v221 = vpop.permute.xlu0 %220
        %224 = vset.pattern.permute.xlu0 0
        %225 = vperm.xlu0 %224, %v181
        %v226 = vpop.permute.xlu0 %225
        %vm228 = vcmask 261120
        %v230 = vsel %vm228, %v177, 0
        %v233 = vsel %vm228, %v178, 0
        %235 = vmatprep.subr.mxu0 %v187
        %236 = vmatpush1.msra.mxu0 %v186
        %237 = vmatprep.subr.mxu0 %v195
        %238 = vmatpush1.msra.mxu0 %v194
        %239 = vmatprep.subr.mxu0 %v203
        %240 = vmatpush1.msra.mxu0 %v202
        %241 = vmatprep.subr.mxu0 %v211
        %242 = vmatpush1.msra.mxu0 %v210
        %243 = vmatprep.subr.mxu0 0.0
        %244 = vmatpush1.msra.mxu0 0.0
        %245 = vmatprep.subr.mxu0 0.0
        %246 = vmatpush1.msra.mxu0 0.0
        %247 = vmatprep.subr.mxu0 0.0
        %248 = vmatpush1.msra.mxu0 0.0
        %249 = vmatprep.subr.mxu0 0.0
        %250 = vmatpush1.msra.mxu0 0.0
        %251 = vmatprep.subr.mxu0 0.0
        %252 = vmatpush1.msra.mxu0 0.0
        %253 = vmatprep.subr.mxu0 0.0
        %254 = vmatpush1.msra.mxu0 0.0
        %255 = vmatprep.subr.mxu0 0.0
        %256 = vmatpush1.msra.mxu0 0.0
        %257 = vmatprep.subr.mxu0 0.0
        %258 = vmatpush1.msra.mxu0 0.0
        %259 = vmatprep.subr.mxu0 0.0
        %260 = vmatpush1.msra.mxu0 0.0
        %261 = vmatprep.subr.mxu0 0.0
        %262 = vmatpush1.msra.mxu0 0.0
        %263 = vmatprep.subr.mxu0 0.0
        %264 = vmatpush1.msra.mxu0 0.0
        %265 = vmatprep.subr.mxu0 0.0
        %266 = vmatpush1.msra.mxu0 0.0
        %267 = vmatprep.subr.mxu0 0.0
        %268 = vmatpush1.msra.mxu0 0.0
        %269 = vmatprep.subr.mxu0 0.0
        %270 = vmatpush1.msra.mxu0 0.0
        %271 = vmatprep.subr.mxu0 0.0
        %272 = vmatpush1.msra.mxu0 0.0
        %273 = vmatprep.subr.mxu0 0.0
        %274 = vmatpush1.msra.mxu0 0.0
        %275 = vmatprep.subr.mxu0 0.0
        %276 = vmatpush1.msra.mxu0 0.0
        %277 = vmatprep.subr.mxu0 0.0
        %278 = vmatpush1.msra.mxu0 0.0
        %279 = vmatprep.subr.mxu0 0.0
        %280 = vmatpush1.msra.mxu0 0.0
        %281 = vmatprep.subr.mxu0 0.0
        %282 = vmatpush1.msra.mxu0 0.0
        %283 = vmatprep.subr.mxu0 0.0
        %284 = vmatpush1.msra.mxu0 0.0
        %285 = vmatprep.subr.mxu0 0.0
        %286 = vmatpush1.msra.mxu0 0.0
        %287 = vmatprep.subr.mxu0 0.0
        %288 = vmatpush1.msra.mxu0 0.0
        %289 = vmatprep.subr.mxu0 0.0
        %290 = vmatpush1.msra.mxu0 0.0
        %291 = vmatprep.subr.mxu0 0.0
        %292 = vmatpush1.msra.mxu0 0.0
        %293 = vmatprep.subr.mxu0 0.0
        %294 = vmatpush1.msra.mxu0 0.0
        %295 = vmatprep.subr.mxu0 0.0
        %296 = vmatpush1.msra.mxu0 0.0
        %297 = vmatprep.subr.mxu0 0.0
        %298 = vmatpush1.msra.mxu0 0.0
        %299 = vmatprep.mubr.f32.mxu0 0.0
        %300 = vmatmul.mubr.f32.gmra.mrb[0].mxu0 %v230
        %v301 = vpop.f32.mrb[0].mxu0
        %v302 = vadd.f32 %v221, %v301
        %v303 = vpop.f32.mrb[0].mxu0
        %v304 = vadd.f32 %v221, %v303
        %305 = vmatprep.mubr.f32.mxu0 0.0
        %306 = vmatmul.mubr.f32.gmra.mrb[0].mxu0 %v233
        %v307 = vpop.f32.mrb[0].mxu0
        %v308 = vadd.f32 %v226, %v307
        %v309 = vpop.f32.mrb[0].mxu0
        %v310 = vadd.f32 %v226, %v309
        %311 = vdwg.mxu0
        %312 = vmatprep.subr.mxu0 %v189
        %313 = vmatpush1.msra.mxu0 %v188
        %314 = vmatprep.subr.mxu0 %v197
        %315 = vmatpush1.msra.mxu0 %v196
        %316 = vmatprep.subr.mxu0 %v205
        %317 = vmatpush1.msra.mxu0 %v204
        %318 = vmatprep.subr.mxu0 %v213
        %319 = vmatpush1.msra.mxu0 %v212
        %320 = vmatprep.subr.mxu0 0.0
        %321 = vmatpush1.msra.mxu0 0.0
        %322 = vmatprep.subr.mxu0 0.0
        %323 = vmatpush1.msra.mxu0 0.0
        %324 = vmatprep.subr.mxu0 0.0
        %325 = vmatpush1.msra.mxu0 0.0
        %326 = vmatprep.subr.mxu0 0.0
        %327 = vmatpush1.msra.mxu0 0.0
        %328 = vmatprep.subr.mxu0 0.0
        %329 = vmatpush1.msra.mxu0 0.0
        %330 = vmatprep.subr.mxu0 0.0
        %331 = vmatpush1.msra.mxu0 0.0
        %332 = vmatprep.subr.mxu0 0.0
        %333 = vmatpush1.msra.mxu0 0.0
        %334 = vmatprep.subr.mxu0 0.0
        %335 = vmatpush1.msra.mxu0 0.0
        %336 = vmatprep.subr.mxu0 0.0
        %337 = vmatpush1.msra.mxu0 0.0
        %338 = vmatprep.subr.mxu0 0.0
        %339 = vmatpush1.msra.mxu0 0.0
        %340 = vmatprep.subr.mxu0 0.0
        %341 = vmatpush1.msra.mxu0 0.0
        %342 = vmatprep.subr.mxu0 0.0
        %343 = vmatpush1.msra.mxu0 0.0
        %344 = vmatprep.subr.mxu0 0.0
        %345 = vmatpush1.msra.mxu0 0.0
        %346 = vmatprep.subr.mxu0 0.0
        %347 = vmatpush1.msra.mxu0 0.0
        %348 = vmatprep.subr.mxu0 0.0
        %349 = vmatpush1.msra.mxu0 0.0
        %350 = vmatprep.subr.mxu0 0.0
        %351 = vmatpush1.msra.mxu0 0.0
        %352 = vmatprep.subr.mxu0 0.0
        %353 = vmatpush1.msra.mxu0 0.0
        %354 = vmatprep.subr.mxu0 0.0
        %355 = vmatpush1.msra.mxu0 0.0
        %356 = vmatprep.subr.mxu0 0.0
        %357 = vmatpush1.msra.mxu0 0.0
        %358 = vmatprep.subr.mxu0 0.0
        %359 = vmatpush1.msra.mxu0 0.0
        %360 = vmatprep.subr.mxu0 0.0
        %361 = vmatpush1.msra.mxu0 0.0
        %362 = vmatprep.subr.mxu0 0.0
        %363 = vmatpush1.msra.mxu0 0.0
        %364 = vmatprep.subr.mxu0 0.0
        %365 = vmatpush1.msra.mxu0 0.0
        %366 = vmatprep.subr.mxu0 0.0
        %367 = vmatpush1.msra.mxu0 0.0
        %368 = vmatprep.subr.mxu0 0.0
        %369 = vmatpush1.msra.mxu0 0.0
        %370 = vmatprep.subr.mxu0 0.0
        %371 = vmatpush1.msra.mxu0 0.0
        %372 = vmatprep.subr.mxu0 0.0
        %373 = vmatpush1.msra.mxu0 0.0
        %374 = vmatprep.subr.mxu0 0.0
        %375 = vmatpush1.msra.mxu0 0.0
        %376 = vmatprep.mubr.f32.mxu0 0.0
        %377 = vmatmul.mubr.f32.gmra.mrb[0].mxu0 %v230
        %v378 = vpop.f32.mrb[0].mxu0
        %v379 = vadd.f32 %v221, %v378
        %v380 = vpop.f32.mrb[0].mxu0
        %v381 = vadd.f32 %v221, %v380
        %382 = vmatprep.mubr.f32.mxu0 0.0
        %383 = vmatmul.mubr.f32.gmra.mrb[0].mxu0 %v233
        %v384 = vpop.f32.mrb[0].mxu0
        %v385 = vadd.f32 %v226, %v384
        %v386 = vpop.f32.mrb[0].mxu0
        %v387 = vadd.f32 %v226, %v386
        %388 = vdwg.mxu0
        %389 = vmatprep.subr.mxu0 %v191
        %390 = vmatpush1.msra.mxu0 %v190
        %391 = vmatprep.subr.mxu0 %v199
        %392 = vmatpush1.msra.mxu0 %v198
        %393 = vmatprep.subr.mxu0 %v207
        %394 = vmatpush1.msra.mxu0 %v206
        %395 = vmatprep.subr.mxu0 %v215
        %396 = vmatpush1.msra.mxu0 %v214
        %397 = vmatprep.subr.mxu0 0.0
        %398 = vmatpush1.msra.mxu0 0.0
        %399 = vmatprep.subr.mxu0 0.0
        %400 = vmatpush1.msra.mxu0 0.0
        %401 = vmatprep.subr.mxu0 0.0
        %402 = vmatpush1.msra.mxu0 0.0
        %403 = vmatprep.subr.mxu0 0.0
        %404 = vmatpush1.msra.mxu0 0.0
        %405 = vmatprep.subr.mxu0 0.0
        %406 = vmatpush1.msra.mxu0 0.0
        %407 = vmatprep.subr.mxu0 0.0
        %408 = vmatpush1.msra.mxu0 0.0
        %409 = vmatprep.subr.mxu0 0.0
        %410 = vmatpush1.msra.mxu0 0.0
        %411 = vmatprep.subr.mxu0 0.0
        %412 = vmatpush1.msra.mxu0 0.0
        %413 = vmatprep.subr.mxu0 0.0
        %414 = vmatpush1.msra.mxu0 0.0
        %415 = vmatprep.subr.mxu0 0.0
        %416 = vmatpush1.msra.mxu0 0.0
        %417 = vmatprep.subr.mxu0 0.0
        %418 = vmatpush1.msra.mxu0 0.0
        %419 = vmatprep.subr.mxu0 0.0
        %420 = vmatpush1.msra.mxu0 0.0
        %421 = vmatprep.subr.mxu0 0.0
        %422 = vmatpush1.msra.mxu0 0.0
        %423 = vmatprep.subr.mxu0 0.0
        %424 = vmatpush1.msra.mxu0 0.0
        %425 = vmatprep.subr.mxu0 0.0
        %426 = vmatpush1.msra.mxu0 0.0
        %427 = vmatprep.subr.mxu0 0.0
        %428 = vmatpush1.msra.mxu0 0.0
        %429 = vmatprep.subr.mxu0 0.0
        %430 = vmatpush1.msra.mxu0 0.0
        %431 = vmatprep.subr.mxu0 0.0
        %432 = vmatpush1.msra.mxu0 0.0
        %433 = vmatprep.subr.mxu0 0.0
        %434 = vmatpush1.msra.mxu0 0.0
        %435 = vmatprep.subr.mxu0 0.0
        %436 = vmatpush1.msra.mxu0 0.0
        %437 = vmatprep.subr.mxu0 0.0
        %438 = vmatpush1.msra.mxu0 0.0
        %439 = vmatprep.subr.mxu0 0.0
        %440 = vmatpush1.msra.mxu0 0.0
        %441 = vmatprep.subr.mxu0 0.0
        %442 = vmatpush1.msra.mxu0 0.0
        %443 = vmatprep.subr.mxu0 0.0
        %444 = vmatpush1.msra.mxu0 0.0
        %445 = vmatprep.subr.mxu0 0.0
        %446 = vmatpush1.msra.mxu0 0.0
        %447 = vmatprep.subr.mxu0 0.0
        %448 = vmatpush1.msra.mxu0 0.0
        %449 = vmatprep.subr.mxu0 0.0
        %450 = vmatpush1.msra.mxu0 0.0
        %451 = vmatprep.subr.mxu0 0.0
        %452 = vmatpush1.msra.mxu0 0.0
        %453 = vmatprep.mubr.f32.mxu0 0.0
        %454 = vmatmul.mubr.f32.gmra.mrb[0].mxu0 %v230
        %v455 = vpop.f32.mrb[0].mxu0
        %v456 = vadd.f32 %v221, %v455
        %v457 = vpop.f32.mrb[0].mxu0
        %v458 = vadd.f32 %v221, %v457
        %459 = vmatprep.mubr.f32.mxu0 0.0
        %460 = vmatmul.mubr.f32.gmra.mrb[0].mxu0 %v233
        %v461 = vpop.f32.mrb[0].mxu0
        %v462 = vadd.f32 %v226, %v461
        %v463 = vpop.f32.mrb[0].mxu0
        %v464 = vadd.f32 %v226, %v463
        %465 = vdwg.mxu0
        %466 = vmatprep.subr.mxu0 %v193
        %467 = vmatpush1.msra.mxu0 %v192
        %468 = vmatprep.subr.mxu0 %v201
        %469 = vmatpush1.msra.mxu0 %v200
        %470 = vmatprep.subr.mxu0 %v209
        %471 = vmatpush1.msra.mxu0 %v208
        %472 = vmatprep.subr.mxu0 %v217
        %473 = vmatpush1.msra.mxu0 %v216
        %474 = vmatprep.subr.mxu0 0.0
        %475 = vmatpush1.msra.mxu0 0.0
        %476 = vmatprep.subr.mxu0 0.0
        %477 = vmatpush1.msra.mxu0 0.0
        %478 = vmatprep.subr.mxu0 0.0
        %479 = vmatpush1.msra.mxu0 0.0
        %480 = vmatprep.subr.mxu0 0.0
        %481 = vmatpush1.msra.mxu0 0.0
        %482 = vmatprep.subr.mxu0 0.0
        %483 = vmatpush1.msra.mxu0 0.0
        %484 = vmatprep.subr.mxu0 0.0
        %485 = vmatpush1.msra.mxu0 0.0
        %486 = vmatprep.subr.mxu0 0.0
        %487 = vmatpush1.msra.mxu0 0.0
        %488 = vmatprep.subr.mxu0 0.0
        %489 = vmatpush1.msra.mxu0 0.0
        %490 = vmatprep.subr.mxu0 0.0
        %491 = vmatpush1.msra.mxu0 0.0
        %492 = vmatprep.subr.mxu0 0.0
        %493 = vmatpush1.msra.mxu0 0.0
        %494 = vmatprep.subr.mxu0 0.0
        %495 = vmatpush1.msra.mxu0 0.0
        %496 = vmatprep.subr.mxu0 0.0
        %497 = vmatpush1.msra.mxu0 0.0
        %498 = vmatprep.subr.mxu0 0.0
        %499 = vmatpush1.msra.mxu0 0.0
        %500 = vmatprep.subr.mxu0 0.0
        %501 = vmatpush1.msra.mxu0 0.0
        %502 = vmatprep.subr.mxu0 0.0
        %503 = vmatpush1.msra.mxu0 0.0
        %504 = vmatprep.subr.mxu0 0.0
        %505 = vmatpush1.msra.mxu0 0.0
        %506 = vmatprep.subr.mxu0 0.0
        %507 = vmatpush1.msra.mxu0 0.0
        %508 = vmatprep.subr.mxu0 0.0
        %509 = vmatpush1.msra.mxu0 0.0
        %510 = vmatprep.subr.mxu0 0.0
        %511 = vmatpush1.msra.mxu0 0.0
        %512 = vmatprep.subr.mxu0 0.0
        %513 = vmatpush1.msra.mxu0 0.0
        %514 = vmatprep.subr.mxu0 0.0
        %515 = vmatpush1.msra.mxu0 0.0
        %516 = vmatprep.subr.mxu0 0.0
        %517 = vmatpush1.msra.mxu0 0.0
        %518 = vmatprep.subr.mxu0 0.0
        %519 = vmatpush1.msra.mxu0 0.0
        %520 = vmatprep.subr.mxu0 0.0
        %521 = vmatpush1.msra.mxu0 0.0
        %522 = vmatprep.subr.mxu0 0.0
        %523 = vmatpush1.msra.mxu0 0.0
        %524 = vmatprep.subr.mxu0 0.0
        %525 = vmatpush1.msra.mxu0 0.0
        %526 = vmatprep.subr.mxu0 0.0
        %527 = vmatpush1.msra.mxu0 0.0
        %528 = vmatprep.subr.mxu0 0.0
        %529 = vmatpush1.msra.mxu0 0.0
        %530 = vmatprep.mubr.f32.mxu0 0.0
        %531 = vmatmul.mubr.f32.gmra.mrb[0].mxu0 %v230
        %v532 = vpop.f32.mrb[0].mxu0
        %v533 = vadd.f32 %v221, %v532
        %v534 = vpop.f32.mrb[0].mxu0
        %v535 = vadd.f32 %v221, %v534
        %536 = vmatprep.mubr.f32.mxu0 0.0
        %537 = vmatmul.mubr.f32.gmra.mrb[0].mxu0 %v233
        %v538 = vpop.f32.mrb[0].mxu0
        %v539 = vadd.f32 %v226, %v538
        %v540 = vpop.f32.mrb[0].mxu0
        %v541 = vadd.f32 %v226, %v540
        %542 = vdwg.mxu0
        %v543 = vmax.f32 %v302, 0.0
        %v544 = vmax.f32 %v304, 0.0
        %v545 = vmax.f32 %v379, 0.0
        %v546 = vmax.f32 %v381, 0.0
        %v547 = vmax.f32 %v456, 0.0
        %v548 = vmax.f32 %v458, 0.0
        %v549 = vmax.f32 %v533, 0.0
        %v550 = vmax.f32 %v535, 0.0
        %v551 = vmax.f32 %v308, 0.0
        %v552 = vmax.f32 %v310, 0.0
        %v553 = vmax.f32 %v385, 0.0
        %v554 = vmax.f32 %v387, 0.0
        %v555 = vmax.f32 %v462, 0.0
        %v556 = vmax.f32 %v464, 0.0
        %v557 = vmax.f32 %v539, 0.0
        %v558 = vmax.f32 %v541, 0.0
        %v559 = vadd.f32 %v543, %v551
        %v560 = vrot.slane %v559, 4
        %v561 = vadd.f32 %v559, %v560
        %v562 = vrot.slane %v561, 2
        %v563 = vadd.f32 %v561, %v562
        %v564 = vrot.slane %v563, 1
        %v565 = vadd.f32 %v563, %v564
        %v566 = vadd.f32 %v544, %v552
        %v567 = vrot.slane %v566, 4
        %v568 = vadd.f32 %v566, %v567
        %v569 = vrot.slane %v568, 2
        %v570 = vadd.f32 %v568, %v569
        %v571 = vrot.slane %v570, 1
        %v572 = vadd.f32 %v570, %v571
        %v573 = vadd.f32 %v545, %v553
        %v574 = vrot.slane %v573, 4
        %v575 = vadd.f32 %v573, %v574
        %v576 = vrot.slane %v575, 2
        %v577 = vadd.f32 %v575, %v576
        %v578 = vrot.slane %v577, 1
        %v579 = vadd.f32 %v577, %v578
        %v580 = vadd.f32 %v546, %v554
        %v581 = vrot.slane %v580, 4
        %v582 = vadd.f32 %v580, %v581
        %v583 = vrot.slane %v582, 2
        %v584 = vadd.f32 %v582, %v583
        %v585 = vrot.slane %v584, 1
        %v586 = vadd.f32 %v584, %v585
        %v587 = vadd.f32 %v547, %v555
        %v588 = vrot.slane %v587, 4
        %v589 = vadd.f32 %v587, %v588
        %v590 = vrot.slane %v589, 2
        %v591 = vadd.f32 %v589, %v590
        %v592 = vrot.slane %v591, 1
        %v593 = vadd.f32 %v591, %v592
        %v594 = vadd.f32 %v548, %v556
        %v595 = vrot.slane %v594, 4
        %v596 = vadd.f32 %v594, %v595
        %v597 = vrot.slane %v596, 2
        %v598 = vadd.f32 %v596, %v597
        %v599 = vrot.slane %v598, 1
        %v600 = vadd.f32 %v598, %v599
        %v601 = vadd.f32 %v549, %v557
        %v602 = vrot.slane %v601, 4
        %v603 = vadd.f32 %v601, %v602
        %v604 = vrot.slane %v603, 2
        %v605 = vadd.f32 %v603, %v604
        %v606 = vrot.slane %v605, 1
        %v607 = vadd.f32 %v605, %v606
        %v608 = vadd.f32 %v550, %v558
        %v609 = vrot.slane %v608, 4
        %v610 = vadd.f32 %v608, %v609
        %v611 = vrot.slane %v610, 2
        %v612 = vadd.f32 %v610, %v611
        %v613 = vrot.slane %v612, 1
        %v614 = vadd.f32 %v612, %v613
        %v615 = vrcp.pop 16.0
        %v616 = vmul.f32 %v565, %v615
        %v617 = vmul.f32 %v572, %v615
        %v618 = vmul.f32 %v579, %v615
        %v619 = vmul.f32 %v586, %v615
        %v620 = vmul.f32 %v593, %v615
        %v621 = vmul.f32 %v600, %v615
        %v622 = vmul.f32 %v607, %v615
        %v623 = vmul.f32 %v614, %v615
        %v624 = vmul.f32 %v543, %v543
        %v625 = vmul.f32 %v544, %v544
        %v626 = vmul.f32 %v545, %v545
        %v627 = vmul.f32 %v546, %v546
        %v628 = vmul.f32 %v547, %v547
        %v629 = vmul.f32 %v548, %v548
        %v630 = vmul.f32 %v549, %v549
        %v631 = vmul.f32 %v550, %v550
        %v632 = vmul.f32 %v551, %v551
        %v633 = vmul.f32 %v552, %v552
        %v634 = vmul.f32 %v553, %v553
        %v635 = vmul.f32 %v554, %v554
        %v636 = vmul.f32 %v555, %v555
        %v637 = vmul.f32 %v556, %v556
        %v638 = vmul.f32 %v557, %v557
        %v639 = vmul.f32 %v558, %v558
        %v640 = vadd.f32 %v624, %v632
        %v641 = vrot.slane %v640, 4
        %v642 = vadd.f32 %v640, %v641
        %v643 = vrot.slane %v642, 2
        %v644 = vadd.f32 %v642, %v643
        %v645 = vrot.slane %v644, 1
        %v646 = vadd.f32 %v644, %v645
        %v647 = vadd.f32 %v625, %v633
        %v648 = vrot.slane %v647, 4
        %v649 = vadd.f32 %v647, %v648
        %v650 = vrot.slane %v649, 2
        %v651 = vadd.f32 %v649, %v650
        %v652 = vrot.slane %v651, 1
        %v653 = vadd.f32 %v651, %v652
        %v654 = vadd.f32 %v626, %v634
        %v655 = vrot.slane %v654, 4
        %v656 = vadd.f32 %v654, %v655
        %v657 = vrot.slane %v656, 2
        %v658 = vadd.f32 %v656, %v657
        %v659 = vrot.slane %v658, 1
        %v660 = vadd.f32 %v658, %v659
        %v661 = vadd.f32 %v627, %v635
        %v662 = vrot.slane %v661, 4
        %v663 = vadd.f32 %v661, %v662
        %v664 = vrot.slane %v663, 2
        %v665 = vadd.f32 %v663, %v664
        %v666 = vrot.slane %v665, 1
        %v667 = vadd.f32 %v665, %v666
        %v668 = vadd.f32 %v628, %v636
        %v669 = vrot.slane %v668, 4
        %v670 = vadd.f32 %v668, %v669
        %v671 = vrot.slane %v670, 2
        %v672 = vadd.f32 %v670, %v671
        %v673 = vrot.slane %v672, 1
        %v674 = vadd.f32 %v672, %v673
        %v675 = vadd.f32 %v629, %v637
        %v676 = vrot.slane %v675, 4
        %v677 = vadd.f32 %v675, %v676
        %v678 = vrot.slane %v677, 2
        %v679 = vadd.f32 %v677, %v678
        %v680 = vrot.slane %v679, 1
        %v681 = vadd.f32 %v679, %v680
        %v682 = vadd.f32 %v630, %v638
        %v683 = vrot.slane %v682, 4
        %v684 = vadd.f32 %v682, %v683
        %v685 = vrot.slane %v684, 2
        %v686 = vadd.f32 %v684, %v685
        %v687 = vrot.slane %v686, 1
        %v688 = vadd.f32 %v686, %v687
        %v689 = vadd.f32 %v631, %v639
        %v690 = vrot.slane %v689, 4
        %v691 = vadd.f32 %v689, %v690
        %v692 = vrot.slane %v691, 2
        %v693 = vadd.f32 %v691, %v692
        %v694 = vrot.slane %v693, 1
        %v695 = vadd.f32 %v693, %v694
        %v696 = vmul.f32 %v646, %v615
        %v697 = vmul.f32 %v653, %v615
        %v698 = vmul.f32 %v660, %v615
        %v699 = vmul.f32 %v667, %v615
        %v700 = vmul.f32 %v674, %v615
        %v701 = vmul.f32 %v681, %v615
        %v702 = vmul.f32 %v688, %v615
        %v703 = vmul.f32 %v695, %v615
        %v704 = vmul.f32 %v616, %v616
        %v705 = vmul.f32 %v617, %v617
        %v706 = vmul.f32 %v618, %v618
        %v707 = vmul.f32 %v619, %v619
        %v708 = vmul.f32 %v620, %v620
        %v709 = vmul.f32 %v621, %v621
        %v710 = vmul.f32 %v622, %v622
        %v711 = vmul.f32 %v623, %v623
        %v712 = vsub.f32 %v696, %v704
        %v713 = vsub.f32 %v697, %v705
        %v714 = vsub.f32 %v698, %v706
        %v715 = vsub.f32 %v699, %v707
        %v716 = vsub.f32 %v700, %v708
        %v717 = vsub.f32 %v701, %v709
        %v718 = vsub.f32 %v702, %v710
        %v719 = vsub.f32 %v703, %v711
        %v720 = vmax.f32 %v712, 0.0
        %v721 = vmax.f32 %v713, 0.0
        %v722 = vmax.f32 %v714, 0.0
        %v723 = vmax.f32 %v715, 0.0
        %v724 = vmax.f32 %v716, 0.0
        %v725 = vmax.f32 %v717, 0.0
        %v726 = vmax.f32 %v718, 0.0
        %v727 = vmax.f32 %v719, 0.0
        %v728 = vsub.f32 %v543, %v616
        %v729 = vsub.f32 %v544, %v617
        %v730 = vsub.f32 %v545, %v618
        %v731 = vsub.f32 %v546, %v619
        %v732 = vsub.f32 %v547, %v620
        %v733 = vsub.f32 %v548, %v621
        %v734 = vsub.f32 %v549, %v622
        %v735 = vsub.f32 %v550, %v623
        %v736 = vsub.f32 %v551, %v616
        %v737 = vsub.f32 %v552, %v617
        %v738 = vsub.f32 %v553, %v618
        %v739 = vsub.f32 %v554, %v619
        %v740 = vsub.f32 %v555, %v620
        %v741 = vsub.f32 %v556, %v621
        %v742 = vsub.f32 %v557, %v622
        %v743 = vsub.f32 %v558, %v623
        %v744 = vadd.f32 %v720, 1e-05
        %v745 = vadd.f32 %v721, 1e-05
        %v746 = vadd.f32 %v722, 1e-05
        %v747 = vadd.f32 %v723, 1e-05
        %v748 = vadd.f32 %v724, 1e-05
        %v749 = vadd.f32 %v725, 1e-05
        %v750 = vadd.f32 %v726, 1e-05
        %v751 = vadd.f32 %v727, 1e-05
        %v752 = vrsqrt.pop %v744
        %v753 = vrsqrt.pop %v745
        %v754 = vrsqrt.pop %v746
        %v755 = vrsqrt.pop %v747
        %v756 = vrsqrt.pop %v748
        %v757 = vrsqrt.pop %v749
        %v758 = vrsqrt.pop %v750
        %v759 = vrsqrt.pop %v751
        %v760 = vmul.f32 %v728, %v752
        %v761 = vmul.f32 %v729, %v753
        %v762 = vmul.f32 %v730, %v754
        %v763 = vmul.f32 %v731, %v755
        %v764 = vmul.f32 %v732, %v756
        %v765 = vmul.f32 %v733, %v757
        %v766 = vmul.f32 %v734, %v758
        %v767 = vmul.f32 %v735, %v759
        %v768 = vmul.f32 %v736, %v752
        %v769 = vmul.f32 %v737, %v753
        %v770 = vmul.f32 %v738, %v754
        %v771 = vmul.f32 %v739, %v755
        %v772 = vmul.f32 %v740, %v756
        %v773 = vmul.f32 %v741, %v757
        %v774 = vmul.f32 %v742, %v758
        %v775 = vmul.f32 %v743, %v759
        %777 = vset.pattern.permute.xlu0 0
        %778 = vperm.xlu0 %777, %v182
        %v779 = vpop.permute.xlu0 %778
        %vm781 = vcmask 130048
        %v783 = vsel %vm781, %v179, 0
        %785 = vmatprep.subr.mxu0 %v761
        %786 = vmatpush1.msra.mxu0 %v760
        %787 = vmatprep.subr.mxu0 %v769
        %788 = vmatpush1.msra.mxu0 %v768
        %789 = vmatprep.subr.mxu0 0.0
        %790 = vmatpush1.msra.mxu0 0.0
        %791 = vmatprep.subr.mxu0 0.0
        %792 = vmatpush1.msra.mxu0 0.0
        %793 = vmatprep.subr.mxu0 0.0
        %794 = vmatpush1.msra.mxu0 0.0
        %795 = vmatprep.subr.mxu0 0.0
        %796 = vmatpush1.msra.mxu0 0.0
        %797 = vmatprep.subr.mxu0 0.0
        %798 = vmatpush1.msra.mxu0 0.0
        %799 = vmatprep.subr.mxu0 0.0
        %800 = vmatpush1.msra.mxu0 0.0
        %801 = vmatprep.subr.mxu0 0.0
        %802 = vmatpush1.msra.mxu0 0.0
        %803 = vmatprep.subr.mxu0 0.0
        %804 = vmatpush1.msra.mxu0 0.0
        %805 = vmatprep.subr.mxu0 0.0
        %806 = vmatpush1.msra.mxu0 0.0
        %807 = vmatprep.subr.mxu0 0.0
        %808 = vmatpush1.msra.mxu0 0.0
        %809 = vmatprep.subr.mxu0 0.0
        %810 = vmatpush1.msra.mxu0 0.0
        %811 = vmatprep.subr.mxu0 0.0
        %812 = vmatpush1.msra.mxu0 0.0
        %813 = vmatprep.subr.mxu0 0.0
        %814 = vmatpush1.msra.mxu0 0.0
        %815 = vmatprep.subr.mxu0 0.0
        %816 = vmatpush1.msra.mxu0 0.0
        %817 = vmatprep.subr.mxu0 0.0
        %818 = vmatpush1.msra.mxu0 0.0
        %819 = vmatprep.subr.mxu0 0.0
        %820 = vmatpush1.msra.mxu0 0.0
        %821 = vmatprep.subr.mxu0 0.0
        %822 = vmatpush1.msra.mxu0 0.0
        %823 = vmatprep.subr.mxu0 0.0
        %824 = vmatpush1.msra.mxu0 0.0
        %825 = vmatprep.subr.mxu0 0.0
        %826 = vmatpush1.msra.mxu0 0.0
        %827 = vmatprep.subr.mxu0 0.0
        %828 = vmatpush1.msra.mxu0 0.0
        %829 = vmatprep.subr.mxu0 0.0
        %830 = vmatpush1.msra.mxu0 0.0
        %831 = vmatprep.subr.mxu0 0.0
        %832 = vmatpush1.msra.mxu0 0.0
        %833 = vmatprep.subr.mxu0 0.0
        %834 = vmatpush1.msra.mxu0 0.0
        %835 = vmatprep.subr.mxu0 0.0
        %836 = vmatpush1.msra.mxu0 0.0
        %837 = vmatprep.subr.mxu0 0.0
        %838 = vmatpush1.msra.mxu0 0.0
        %839 = vmatprep.subr.mxu0 0.0
        %840 = vmatpush1.msra.mxu0 0.0
        %841 = vmatprep.subr.mxu0 0.0
        %842 = vmatpush1.msra.mxu0 0.0
        %843 = vmatprep.subr.mxu0 0.0
        %844 = vmatpush1.msra.mxu0 0.0
        %845 = vmatprep.subr.mxu0 0.0
        %846 = vmatpush1.msra.mxu0 0.0
        %847 = vmatprep.subr.mxu0 0.0
        %848 = vmatpush1.msra.mxu0 0.0
        %849 = vmatprep.mubr.f32.mxu0 0.0
        %850 = vmatmul.mubr.f32.gmra.mrb[0].mxu0 %v783
        %v851 = vpop.f32.mrb[0].mxu0
        %v852 = vadd.f32 %v779, %v851
        %v853 = vpop.f32.mrb[0].mxu0
        %v854 = vadd.f32 %v779, %v853
        %855 = vdwg.mxu0
        %856 = vmatprep.subr.mxu0 %v763
        %857 = vmatpush1.msra.mxu0 %v762
        %858 = vmatprep.subr.mxu0 %v771
        %859 = vmatpush1.msra.mxu0 %v770
        %860 = vmatprep.subr.mxu0 0.0
        %861 = vmatpush1.msra.mxu0 0.0
        %862 = vmatprep.subr.mxu0 0.0
        %863 = vmatpush1.msra.mxu0 0.0
        %864 = vmatprep.subr.mxu0 0.0
        %865 = vmatpush1.msra.mxu0 0.0
        %866 = vmatprep.subr.mxu0 0.0
        %867 = vmatpush1.msra.mxu0 0.0
        %868 = vmatprep.subr.mxu0 0.0
        %869 = vmatpush1.msra.mxu0 0.0
        %870 = vmatprep.subr.mxu0 0.0
        %871 = vmatpush1.msra.mxu0 0.0
        %872 = vmatprep.subr.mxu0 0.0
        %873 = vmatpush1.msra.mxu0 0.0
        %874 = vmatprep.subr.mxu0 0.0
        %875 = vmatpush1.msra.mxu0 0.0
        %876 = vmatprep.subr.mxu0 0.0
        %877 = vmatpush1.msra.mxu0 0.0
        %878 = vmatprep.subr.mxu0 0.0
        %879 = vmatpush1.msra.mxu0 0.0
        %880 = vmatprep.subr.mxu0 0.0
        %881 = vmatpush1.msra.mxu0 0.0
        %882 = vmatprep.subr.mxu0 0.0
        %883 = vmatpush1.msra.mxu0 0.0
        %884 = vmatprep.subr.mxu0 0.0
        %885 = vmatpush1.msra.mxu0 0.0
        %886 = vmatprep.subr.mxu0 0.0
        %887 = vmatpush1.msra.mxu0 0.0
        %888 = vmatprep.subr.mxu0 0.0
        %889 = vmatpush1.msra.mxu0 0.0
        %890 = vmatprep.subr.mxu0 0.0
        %891 = vmatpush1.msra.mxu0 0.0
        %892 = vmatprep.subr.mxu0 0.0
        %893 = vmatpush1.msra.mxu0 0.0
        %894 = vmatprep.subr.mxu0 0.0
        %895 = vmatpush1.msra.mxu0 0.0
        %896 = vmatprep.subr.mxu0 0.0
        %897 = vmatpush1.msra.mxu0 0.0
        %898 = vmatprep.subr.mxu0 0.0
        %899 = vmatpush1.msra.mxu0 0.0
        %900 = vmatprep.subr.mxu0 0.0
        %901 = vmatpush1.msra.mxu0 0.0
        %902 = vmatprep.subr.mxu0 0.0
        %903 = vmatpush1.msra.mxu0 0.0
        %904 = vmatprep.subr.mxu0 0.0
        %905 = vmatpush1.msra.mxu0 0.0
        %906 = vmatprep.subr.mxu0 0.0
        %907 = vmatpush1.msra.mxu0 0.0
        %908 = vmatprep.subr.mxu0 0.0
        %909 = vmatpush1.msra.mxu0 0.0
        %910 = vmatprep.subr.mxu0 0.0
        %911 = vmatpush1.msra.mxu0 0.0
        %912 = vmatprep.subr.mxu0 0.0
        %913 = vmatpush1.msra.mxu0 0.0
        %914 = vmatprep.subr.mxu0 0.0
        %915 = vmatpush1.msra.mxu0 0.0
        %916 = vmatprep.subr.mxu0 0.0
        %917 = vmatpush1.msra.mxu0 0.0
        %918 = vmatprep.subr.mxu0 0.0
        %919 = vmatpush1.msra.mxu0 0.0
        %920 = vmatprep.mubr.f32.mxu0 0.0
        %921 = vmatmul.mubr.f32.gmra.mrb[0].mxu0 %v783
        %v922 = vpop.f32.mrb[0].mxu0
        %v923 = vadd.f32 %v779, %v922
        %v924 = vpop.f32.mrb[0].mxu0
        %v925 = vadd.f32 %v779, %v924
        %926 = vdwg.mxu0
        %927 = vmatprep.subr.mxu0 %v765
        %928 = vmatpush1.msra.mxu0 %v764
        %929 = vmatprep.subr.mxu0 %v773
        %930 = vmatpush1.msra.mxu0 %v772
        %931 = vmatprep.subr.mxu0 0.0
        %932 = vmatpush1.msra.mxu0 0.0
        %933 = vmatprep.subr.mxu0 0.0
        %934 = vmatpush1.msra.mxu0 0.0
        %935 = vmatprep.subr.mxu0 0.0
        %936 = vmatpush1.msra.mxu0 0.0
        %937 = vmatprep.subr.mxu0 0.0
        %938 = vmatpush1.msra.mxu0 0.0
        %939 = vmatprep.subr.mxu0 0.0
        %940 = vmatpush1.msra.mxu0 0.0
        %941 = vmatprep.subr.mxu0 0.0
        %942 = vmatpush1.msra.mxu0 0.0
        %943 = vmatprep.subr.mxu0 0.0
        %944 = vmatpush1.msra.mxu0 0.0
        %945 = vmatprep.subr.mxu0 0.0
        %946 = vmatpush1.msra.mxu0 0.0
        %947 = vmatprep.subr.mxu0 0.0
        %948 = vmatpush1.msra.mxu0 0.0
        %949 = vmatprep.subr.mxu0 0.0
        %950 = vmatpush1.msra.mxu0 0.0
        %951 = vmatprep.subr.mxu0 0.0
        %952 = vmatpush1.msra.mxu0 0.0
        %953 = vmatprep.subr.mxu0 0.0
        %954 = vmatpush1.msra.mxu0 0.0
        %955 = vmatprep.subr.mxu0 0.0
        %956 = vmatpush1.msra.mxu0 0.0
        %957 = vmatprep.subr.mxu0 0.0
        %958 = vmatpush1.msra.mxu0 0.0
        %959 = vmatprep.subr.mxu0 0.0
        %960 = vmatpush1.msra.mxu0 0.0
        %961 = vmatprep.subr.mxu0 0.0
        %962 = vmatpush1.msra.mxu0 0.0
        %963 = vmatprep.subr.mxu0 0.0
        %964 = vmatpush1.msra.mxu0 0.0
        %965 = vmatprep.subr.mxu0 0.0
        %966 = vmatpush1.msra.mxu0 0.0
        %967 = vmatprep.subr.mxu0 0.0
        %968 = vmatpush1.msra.mxu0 0.0
        %969 = vmatprep.subr.mxu0 0.0
        %970 = vmatpush1.msra.mxu0 0.0
        %971 = vmatprep.subr.mxu0 0.0
        %972 = vmatpush1.msra.mxu0 0.0
        %973 = vmatprep.subr.mxu0 0.0
        %974 = vmatpush1.msra.mxu0 0.0
        %975 = vmatprep.subr.mxu0 0.0
        %976 = vmatpush1.msra.mxu0 0.0
        %977 = vmatprep.subr.mxu0 0.0
        %978 = vmatpush1.msra.mxu0 0.0
        %979 = vmatprep.subr.mxu0 0.0
        %980 = vmatpush1.msra.mxu0 0.0
        %981 = vmatprep.subr.mxu0 0.0
        %982 = vmatpush1.msra.mxu0 0.0
        %983 = vmatprep.subr.mxu0 0.0
        %984 = vmatpush1.msra.mxu0 0.0
        %985 = vmatprep.subr.mxu0 0.0
        %986 = vmatpush1.msra.mxu0 0.0
        %987 = vmatprep.subr.mxu0 0.0
        %988 = vmatpush1.msra.mxu0 0.0
        %989 = vmatprep.subr.mxu0 0.0
        %990 = vmatpush1.msra.mxu0 0.0
        %991 = vmatprep.mubr.f32.mxu0 0.0
        %992 = vmatmul.mubr.f32.gmra.mrb[0].mxu0 %v783
        %v993 = vpop.f32.mrb[0].mxu0
        %v994 = vadd.f32 %v779, %v993
        %v995 = vpop.f32.mrb[0].mxu0
        %v996 = vadd.f32 %v779, %v995
        %997 = vdwg.mxu0
        %998 = vmatprep.subr.mxu0 %v767
        %999 = vmatpush1.msra.mxu0 %v766
        %1000 = vmatprep.subr.mxu0 %v775
        %1001 = vmatpush1.msra.mxu0 %v774
        %1002 = vmatprep.subr.mxu0 0.0
        %1003 = vmatpush1.msra.mxu0 0.0
        %1004 = vmatprep.subr.mxu0 0.0
        %1005 = vmatpush1.msra.mxu0 0.0
        %1006 = vmatprep.subr.mxu0 0.0
        %1007 = vmatpush1.msra.mxu0 0.0
        %1008 = vmatprep.subr.mxu0 0.0
        %1009 = vmatpush1.msra.mxu0 0.0
        %1010 = vmatprep.subr.mxu0 0.0
        %1011 = vmatpush1.msra.mxu0 0.0
        %1012 = vmatprep.subr.mxu0 0.0
        %1013 = vmatpush1.msra.mxu0 0.0
        %1014 = vmatprep.subr.mxu0 0.0
        %1015 = vmatpush1.msra.mxu0 0.0
        %1016 = vmatprep.subr.mxu0 0.0
        %1017 = vmatpush1.msra.mxu0 0.0
        %1018 = vmatprep.subr.mxu0 0.0
        %1019 = vmatpush1.msra.mxu0 0.0
        %1020 = vmatprep.subr.mxu0 0.0
        %1021 = vmatpush1.msra.mxu0 0.0
        %1022 = vmatprep.subr.mxu0 0.0
        %1023 = vmatpush1.msra.mxu0 0.0
        %1024 = vmatprep.subr.mxu0 0.0
        %1025 = vmatpush1.msra.mxu0 0.0
        %1026 = vmatprep.subr.mxu0 0.0
        %1027 = vmatpush1.msra.mxu0 0.0
        %1028 = vmatprep.subr.mxu0 0.0
        %1029 = vmatpush1.msra.mxu0 0.0
        %1030 = vmatprep.subr.mxu0 0.0
        %1031 = vmatpush1.msra.mxu0 0.0
        %1032 = vmatprep.subr.mxu0 0.0
        %1033 = vmatpush1.msra.mxu0 0.0
        %1034 = vmatprep.subr.mxu0 0.0
        %1035 = vmatpush1.msra.mxu0 0.0
        %1036 = vmatprep.subr.mxu0 0.0
        %1037 = vmatpush1.msra.mxu0 0.0
        %1038 = vmatprep.subr.mxu0 0.0
        %1039 = vmatpush1.msra.mxu0 0.0
        %1040 = vmatprep.subr.mxu0 0.0
        %1041 = vmatpush1.msra.mxu0 0.0
        %1042 = vmatprep.subr.mxu0 0.0
        %1043 = vmatpush1.msra.mxu0 0.0
        %1044 = vmatprep.subr.mxu0 0.0
        %1045 = vmatpush1.msra.mxu0 0.0
        %1046 = vmatprep.subr.mxu0 0.0
        %1047 = vmatpush1.msra.mxu0 0.0
        %1048 = vmatprep.subr.mxu0 0.0
        %1049 = vmatpush1.msra.mxu0 0.0
        %1050 = vmatprep.subr.mxu0 0.0
        %1051 = vmatpush1.msra.mxu0 0.0
        %1052 = vmatprep.subr.mxu0 0.0
        %1053 = vmatpush1.msra.mxu0 0.0
        %1054 = vmatprep.subr.mxu0 0.0
        %1055 = vmatpush1.msra.mxu0 0.0
        %1056 = vmatprep.subr.mxu0 0.0
        %1057 = vmatpush1.msra.mxu0 0.0
        %1058 = vmatprep.subr.mxu0 0.0
        %1059 = vmatpush1.msra.mxu0 0.0
        %1060 = vmatprep.subr.mxu0 0.0
        %1061 = vmatpush1.msra.mxu0 0.0
        %1062 = vmatprep.mubr.f32.mxu0 0.0
        %1063 = vmatmul.mubr.f32.gmra.mrb[0].mxu0 %v783
        %v1064 = vpop.f32.mrb[0].mxu0
        %v1065 = vadd.f32 %v779, %v1064
        %v1066 = vpop.f32.mrb[0].mxu0
        %v1067 = vadd.f32 %v779, %v1066
        %1068 = vdwg.mxu0
        %v1069 = vmax.f32 %v852, 0.0
        %v1070 = vmax.f32 %v854, 0.0
        %v1071 = vmax.f32 %v923, 0.0
        %v1072 = vmax.f32 %v925, 0.0
        %v1073 = vmax.f32 %v994, 0.0
        %v1074 = vmax.f32 %v996, 0.0
        %v1075 = vmax.f32 %v1065, 0.0
        %v1076 = vmax.f32 %v1067, 0.0
        %v1077 = vrot.slane %v1069, 4
        %v1078 = vadd.f32 %v1069, %v1077
        %v1079 = vrot.slane %v1078, 2
        %v1080 = vadd.f32 %v1078, %v1079
        %v1081 = vrot.slane %v1080, 1
        %v1082 = vadd.f32 %v1080, %v1081
        %v1083 = vrot.slane %v1070, 4
        %v1084 = vadd.f32 %v1070, %v1083
        %v1085 = vrot.slane %v1084, 2
        %v1086 = vadd.f32 %v1084, %v1085
        %v1087 = vrot.slane %v1086, 1
        %v1088 = vadd.f32 %v1086, %v1087
        %v1089 = vrot.slane %v1071, 4
        %v1090 = vadd.f32 %v1071, %v1089
        %v1091 = vrot.slane %v1090, 2
        %v1092 = vadd.f32 %v1090, %v1091
        %v1093 = vrot.slane %v1092, 1
        %v1094 = vadd.f32 %v1092, %v1093
        %v1095 = vrot.slane %v1072, 4
        %v1096 = vadd.f32 %v1072, %v1095
        %v1097 = vrot.slane %v1096, 2
        %v1098 = vadd.f32 %v1096, %v1097
        %v1099 = vrot.slane %v1098, 1
        %v1100 = vadd.f32 %v1098, %v1099
        %v1101 = vrot.slane %v1073, 4
        %v1102 = vadd.f32 %v1073, %v1101
        %v1103 = vrot.slane %v1102, 2
        %v1104 = vadd.f32 %v1102, %v1103
        %v1105 = vrot.slane %v1104, 1
        %v1106 = vadd.f32 %v1104, %v1105
        %v1107 = vrot.slane %v1074, 4
        %v1108 = vadd.f32 %v1074, %v1107
        %v1109 = vrot.slane %v1108, 2
        %v1110 = vadd.f32 %v1108, %v1109
        %v1111 = vrot.slane %v1110, 1
        %v1112 = vadd.f32 %v1110, %v1111
        %v1113 = vrot.slane %v1075, 4
        %v1114 = vadd.f32 %v1075, %v1113
        %v1115 = vrot.slane %v1114, 2
        %v1116 = vadd.f32 %v1114, %v1115
        %v1117 = vrot.slane %v1116, 1
        %v1118 = vadd.f32 %v1116, %v1117
        %v1119 = vrot.slane %v1076, 4
        %v1120 = vadd.f32 %v1076, %v1119
        %v1121 = vrot.slane %v1120, 2
        %v1122 = vadd.f32 %v1120, %v1121
        %v1123 = vrot.slane %v1122, 1
        %v1124 = vadd.f32 %v1122, %v1123
        %v1125 = vrcp.pop 8.0
        %v1126 = vmul.f32 %v1082, %v1125
        %v1127 = vmul.f32 %v1088, %v1125
        %v1128 = vmul.f32 %v1094, %v1125
        %v1129 = vmul.f32 %v1100, %v1125
        %v1130 = vmul.f32 %v1106, %v1125
        %v1131 = vmul.f32 %v1112, %v1125
        %v1132 = vmul.f32 %v1118, %v1125
        %v1133 = vmul.f32 %v1124, %v1125
        %v1134 = vmul.f32 %v1069, %v1069
        %v1135 = vmul.f32 %v1070, %v1070
        %v1136 = vmul.f32 %v1071, %v1071
        %v1137 = vmul.f32 %v1072, %v1072
        %v1138 = vmul.f32 %v1073, %v1073
        %v1139 = vmul.f32 %v1074, %v1074
        %v1140 = vmul.f32 %v1075, %v1075
        %v1141 = vmul.f32 %v1076, %v1076
        %v1142 = vrot.slane %v1134, 4
        %v1143 = vadd.f32 %v1134, %v1142
        %v1144 = vrot.slane %v1143, 2
        %v1145 = vadd.f32 %v1143, %v1144
        %v1146 = vrot.slane %v1145, 1
        %v1147 = vadd.f32 %v1145, %v1146
        %v1148 = vrot.slane %v1135, 4
        %v1149 = vadd.f32 %v1135, %v1148
        %v1150 = vrot.slane %v1149, 2
        %v1151 = vadd.f32 %v1149, %v1150
        %v1152 = vrot.slane %v1151, 1
        %v1153 = vadd.f32 %v1151, %v1152
        %v1154 = vrot.slane %v1136, 4
        %v1155 = vadd.f32 %v1136, %v1154
        %v1156 = vrot.slane %v1155, 2
        %v1157 = vadd.f32 %v1155, %v1156
        %v1158 = vrot.slane %v1157, 1
        %v1159 = vadd.f32 %v1157, %v1158
        %v1160 = vrot.slane %v1137, 4
        %v1161 = vadd.f32 %v1137, %v1160
        %v1162 = vrot.slane %v1161, 2
        %v1163 = vadd.f32 %v1161, %v1162
        %v1164 = vrot.slane %v1163, 1
        %v1165 = vadd.f32 %v1163, %v1164
        %v1166 = vrot.slane %v1138, 4
        %v1167 = vadd.f32 %v1138, %v1166
        %v1168 = vrot.slane %v1167, 2
        %v1169 = vadd.f32 %v1167, %v1168
        %v1170 = vrot.slane %v1169, 1
        %v1171 = vadd.f32 %v1169, %v1170
        %v1172 = vrot.slane %v1139, 4
        %v1173 = vadd.f32 %v1139, %v1172
        %v1174 = vrot.slane %v1173, 2
        %v1175 = vadd.f32 %v1173, %v1174
        %v1176 = vrot.slane %v1175, 1
        %v1177 = vadd.f32 %v1175, %v1176
        %v1178 = vrot.slane %v1140, 4
        %v1179 = vadd.f32 %v1140, %v1178
        %v1180 = vrot.slane %v1179, 2
        %v1181 = vadd.f32 %v1179, %v1180
        %v1182 = vrot.slane %v1181, 1
        %v1183 = vadd.f32 %v1181, %v1182
        %v1184 = vrot.slane %v1141, 4
        %v1185 = vadd.f32 %v1141, %v1184
        %v1186 = vrot.slane %v1185, 2
        %v1187 = vadd.f32 %v1185, %v1186
        %v1188 = vrot.slane %v1187, 1
        %v1189 = vadd.f32 %v1187, %v1188
        %v1190 = vmul.f32 %v1147, %v1125
        %v1191 = vmul.f32 %v1153, %v1125
        %v1192 = vmul.f32 %v1159, %v1125
        %v1193 = vmul.f32 %v1165, %v1125
        %v1194 = vmul.f32 %v1171, %v1125
        %v1195 = vmul.f32 %v1177, %v1125
        %v1196 = vmul.f32 %v1183, %v1125
        %v1197 = vmul.f32 %v1189, %v1125
        %v1198 = vmul.f32 %v1126, %v1126
        %v1199 = vmul.f32 %v1127, %v1127
        %v1200 = vmul.f32 %v1128, %v1128
        %v1201 = vmul.f32 %v1129, %v1129
        %v1202 = vmul.f32 %v1130, %v1130
        %v1203 = vmul.f32 %v1131, %v1131
        %v1204 = vmul.f32 %v1132, %v1132
        %v1205 = vmul.f32 %v1133, %v1133
        %v1206 = vsub.f32 %v1190, %v1198
        %v1207 = vsub.f32 %v1191, %v1199
        %v1208 = vsub.f32 %v1192, %v1200
        %v1209 = vsub.f32 %v1193, %v1201
        %v1210 = vsub.f32 %v1194, %v1202
        %v1211 = vsub.f32 %v1195, %v1203
        %v1212 = vsub.f32 %v1196, %v1204
        %v1213 = vsub.f32 %v1197, %v1205
        %v1214 = vmax.f32 %v1206, 0.0
        %v1215 = vmax.f32 %v1207, 0.0
        %v1216 = vmax.f32 %v1208, 0.0
        %v1217 = vmax.f32 %v1209, 0.0
        %v1218 = vmax.f32 %v1210, 0.0
        %v1219 = vmax.f32 %v1211, 0.0
        %v1220 = vmax.f32 %v1212, 0.0
        %v1221 = vmax.f32 %v1213, 0.0
        %v1222 = vsub.f32 %v1069, %v1126
        %v1223 = vsub.f32 %v1070, %v1127
        %v1224 = vsub.f32 %v1071, %v1128
        %v1225 = vsub.f32 %v1072, %v1129
        %v1226 = vsub.f32 %v1073, %v1130
        %v1227 = vsub.f32 %v1074, %v1131
        %v1228 = vsub.f32 %v1075, %v1132
        %v1229 = vsub.f32 %v1076, %v1133
        %v1230 = vadd.f32 %v1214, 1e-05
        %v1231 = vadd.f32 %v1215, 1e-05
        %v1232 = vadd.f32 %v1216, 1e-05
        %v1233 = vadd.f32 %v1217, 1e-05
        %v1234 = vadd.f32 %v1218, 1e-05
        %v1235 = vadd.f32 %v1219, 1e-05
        %v1236 = vadd.f32 %v1220, 1e-05
        %v1237 = vadd.f32 %v1221, 1e-05
        %v1238 = vrsqrt.pop %v1230
        %v1239 = vrsqrt.pop %v1231
        %v1240 = vrsqrt.pop %v1232
        %v1241 = vrsqrt.pop %v1233
        %v1242 = vrsqrt.pop %v1234
        %v1243 = vrsqrt.pop %v1235
        %v1244 = vrsqrt.pop %v1236
        %v1245 = vrsqrt.pop %v1237
        %v1246 = vmul.f32 %v1222, %v1238
        %v1247 = vmul.f32 %v1223, %v1239
        %v1248 = vmul.f32 %v1224, %v1240
        %v1249 = vmul.f32 %v1225, %v1241
        %v1250 = vmul.f32 %v1226, %v1242
        %v1251 = vmul.f32 %v1227, %v1243
        %v1252 = vmul.f32 %v1228, %v1244
        %v1253 = vmul.f32 %v1229, %v1245
        %1255 = vset.pattern.permute.xlu0 0
        %1256 = vperm.xlu0 %1255, %v183
        %v1257 = vpop.permute.xlu0 %1256
        %v1259 = vmul.f32 %v1246, %v1257
        %v1260 = vmul.f32 %v1247, %v1257
        %v1261 = vmul.f32 %v1248, %v1257
        %v1262 = vmul.f32 %v1249, %v1257
        %v1263 = vmul.f32 %v1250, %v1257
        %v1264 = vmul.f32 %v1251, %v1257
        %v1265 = vmul.f32 %v1252, %v1257
        %v1266 = vmul.f32 %v1253, %v1257
        %v1267 = vrot.slane %v1259, 4
        %v1268 = vadd.f32 %v1259, %v1267
        %v1269 = vrot.slane %v1268, 2
        %v1270 = vadd.f32 %v1268, %v1269
        %v1271 = vrot.slane %v1270, 1
        %v1272 = vadd.f32 %v1270, %v1271
        %v1273 = vrot.slane %v1260, 4
        %v1274 = vadd.f32 %v1260, %v1273
        %v1275 = vrot.slane %v1274, 2
        %v1276 = vadd.f32 %v1274, %v1275
        %v1277 = vrot.slane %v1276, 1
        %v1278 = vadd.f32 %v1276, %v1277
        %v1279 = vrot.slane %v1261, 4
        %v1280 = vadd.f32 %v1261, %v1279
        %v1281 = vrot.slane %v1280, 2
        %v1282 = vadd.f32 %v1280, %v1281
        %v1283 = vrot.slane %v1282, 1
        %v1284 = vadd.f32 %v1282, %v1283
        %v1285 = vrot.slane %v1262, 4
        %v1286 = vadd.f32 %v1262, %v1285
        %v1287 = vrot.slane %v1286, 2
        %v1288 = vadd.f32 %v1286, %v1287
        %v1289 = vrot.slane %v1288, 1
        %v1290 = vadd.f32 %v1288, %v1289
        %v1291 = vrot.slane %v1263, 4
        %v1292 = vadd.f32 %v1263, %v1291
        %v1293 = vrot.slane %v1292, 2
        %v1294 = vadd.f32 %v1292, %v1293
        %v1295 = vrot.slane %v1294, 1
        %v1296 = vadd.f32 %v1294, %v1295
        %v1297 = vrot.slane %v1264, 4
        %v1298 = vadd.f32 %v1264, %v1297
        %v1299 = vrot.slane %v1298, 2
        %v1300 = vadd.f32 %v1298, %v1299
        %v1301 = vrot.slane %v1300, 1
        %v1302 = vadd.f32 %v1300, %v1301
        %v1303 = vrot.slane %v1265, 4
        %v1304 = vadd.f32 %v1265, %v1303
        %v1305 = vrot.slane %v1304, 2
        %v1306 = vadd.f32 %v1304, %v1305
        %v1307 = vrot.slane %v1306, 1
        %v1308 = vadd.f32 %v1306, %v1307
        %v1309 = vrot.slane %v1266, 4
        %v1310 = vadd.f32 %v1266, %v1309
        %v1311 = vrot.slane %v1310, 2
        %v1312 = vadd.f32 %v1310, %v1311
        %v1313 = vrot.slane %v1312, 1
        %v1314 = vadd.f32 %v1312, %v1313
        %1316 = vset.pattern.permute.xlu0 0
        %1317 = vperm.xlu0 %1316, %v184
        %v1318 = vpop.permute.xlu0 %1317
        %v1320 = vadd.f32 %v1272, %v1318
        %v1321 = vadd.f32 %v1278, %v1318
        %v1322 = vadd.f32 %v1284, %v1318
        %v1323 = vadd.f32 %v1290, %v1318
        %v1324 = vadd.f32 %v1296, %v1318
        %v1325 = vadd.f32 %v1302, %v1318
        %v1326 = vadd.f32 %v1308, %v1318
        %v1327 = vadd.f32 %v1314, %v1318
        %v1328 = vmax.f32 %v1320, 0.0
        %v1329 = vmax.f32 %v1321, 0.0
        %v1330 = vmax.f32 %v1322, 0.0
        %v1331 = vmax.f32 %v1323, 0.0
        %v1332 = vmax.f32 %v1324, 0.0
        %v1333 = vmax.f32 %v1325, 0.0
        %v1334 = vmax.f32 %v1326, 0.0
        %v1335 = vmax.f32 %v1327, 0.0
        %v1336 = vmul.f32 %v1328, %v185
        %v1338 = vrot.slane %v185, 1
        %v1340 = vmul.f32 %v1329, %v1338
        %v1341 = vadd.f32 %v1336, %v1340
        %v1342 = vrot.slane %v185, 2
        %v1344 = vmul.f32 %v1330, %v1342
        %v1345 = vadd.f32 %v1341, %v1344
        %v1346 = vrot.slane %v185, 3
        %v1348 = vmul.f32 %v1331, %v1346
        %v1349 = vadd.f32 %v1345, %v1348
        %v1350 = vrot.slane %v185, 4
        %v1352 = vmul.f32 %v1332, %v1350
        %v1353 = vadd.f32 %v1349, %v1352
        %v1354 = vrot.slane %v185, 5
        %v1356 = vmul.f32 %v1333, %v1354
        %v1357 = vadd.f32 %v1353, %v1356
        %v1358 = vrot.slane %v185, 6
        %v1360 = vmul.f32 %v1334, %v1358
        %v1361 = vadd.f32 %v1357, %v1360
        %v1362 = vrot.slane %v185, 7
        %v1364 = vmul.f32 %v1335, %v1362
        %v1365 = vadd.f32 %v1361, %v1364
        %1366 = vset.pattern.permute.xlu0 1
        %1367 = vperm.xlu0 %1366, %v184
        %v1368 = vpop.permute.xlu0 %1367
        %v1370 = vadd.f32 %v1365, %v1368
        %1371 = vst [vmem:[%s175] sm:$0x1] %v1370
        %s1372 = sand.u32 %s75, 1
        %s1373 = scalar_lea.sflag [#allocation4], %s1372
        %s1374 = sand.u32 %s75, 1
        %s1375 = scalar_lea.vmem [#allocation7], %s1374
        // Predicated region
        $region37: #{tpu_custom_call.1} parent=27 // pred_check
          %p1376 = pneg %p85
        $region38: #{tpu_custom_call.1} parent=27 // pred_check_branch
          %1378 = sbr.rel (%p1376) target = $region40
        $region39: #{tpu_custom_call.1} parent=27 // pred_region
          %s1380 = ssub.s32 16, 16
          %1381 = vsyncadd %s1373, %s1380
          %s1382 = smul.addr %s20, 16
          %s1383 = scalar_lea.hbm %s2, %s1382
          %s1385 = sshll.u32 %s1375, 4
          %s1386 = int_to_ptr.vmem [resolvable:$true] %s1385
          %1388 = dma.vmem_to_hbm [thread:$0]  %s1386, 16, %s1383, %s1373
        $region40: #{tpu_custom_call.1} parent=27 // pred_fallthru
          _
      $region28: #{tpu_custom_call.1} parent=5 // pred_fallthru
        _
      %p1389 = scmp.le.s32.totalorder 2, %s15
      // Predicated region
      $region41: #{tpu_custom_call.1} parent=5 // pred_check
        %p1390 = pneg %p1389
      $region42: #{tpu_custom_call.1} parent=5 // pred_check_branch
        %1392 = sbr.rel (%p1390) target = $region44
      $region43: #{tpu_custom_call.1} parent=5 // pred_region
        %s1393 = ssub.s32 %s15, 2
        // Predicated region
        $region45: #{tpu_custom_call.1} parent=43 // pred_check
          %p1394 = pneg %p91
        $region46: #{tpu_custom_call.1} parent=43 // pred_check_branch
          %1396 = sbr.rel (%p1394) target = $region48
        $region47: #{tpu_custom_call.1} parent=43 // pred_region
          %s1397 = sand.u32 %s76, 1
          %s1398 = scalar_lea.sflag [#allocation4], %s1397
          %s1399 = sand.u32 %s76, 1
          %s1400 = scalar_lea.vmem [#allocation7], %s1399
          %1401 = dma.done %s1398, 16
        $region48: #{tpu_custom_call.1} parent=43 // pred_fallthru
          _
      $region44: #{tpu_custom_call.1} parent=5 // pred_fallthru
        _
    $region6: #{tpu_custom_call.1} parent=1 // loop_footer
      %s19 = sadd.s32 1, %s15
    $region7: #{tpu_custom_call.1} parent=1 // loop_footer_branch
      %14 = sbr.rel target = $region3
    $region8: #{tpu_custom_call.1} parent=1 // loop_exit
      _
    %1402 = vsyncpa [#allocation3], 1
    %s1403 = scalar_lea.sflag [#allocation3], 1
    %1404 = vsyncpa %s1403, 1
    %1405 = vsyncpa [#allocation6], 1
    %1406 = vsyncpa [#allocation4], 1
    %s1407 = scalar_lea.sflag [#allocation4], 1
    %1408 = vsyncpa %s1407, 1

</llo_original>
